<compile_context>
chip_gen: v7x
topology: tpu7x:2x2x1
jax: 0.10.0
libtpu: 0.0.40
codegen_flags: <defaults>
</compile_context>

<pallas_src>
import math

import numpy as np

import jax
import jax.numpy as jnp
from jax.experimental import pallas as pl
from jax.experimental.pallas import tpu as pltpu


def _round_up(x, m):
    return (x + m - 1) // m * m


def _nearest_src_indices(in_size, out_size):
    # PyTorch F.interpolate(mode='nearest'): src = floor(dst * in / out).
    return np.floor(np.arange(out_size) * (in_size / out_size)).astype(np.int64)


def _gather_matrix(b, h, w, fs, lin_pad, lout_pad):
    """One-hot G so that  x2d @ G  does per-batch nearest-neighbor interpolation
    AND lays the result out lane-dense as (channels, b*fs*fs) (block-diagonal
    over batches). Built with numpy at trace time; becomes a constant."""
    n = fs * fs
    hw = h * w
    sh = _nearest_src_indices(h, fs)
    sw = _nearest_src_indices(w, fs)
    src = (sh[:, None] * w + sw[None, :]).reshape(-1)          # (n,) flat source idx
    g = np.zeros((lin_pad, lout_pad), np.float32)
    dst = np.arange(n)
    for k in range(b):
        g[k * hw + src, k * n + dst] = 1.0
    return g


def _make_kernel(e_pad, embedding_type, max_size):
    def kernel(x_ref, g_ref, out_ref):
        # x_ref : (rows, lin_pad)   rows = [diff padded to e_pad | mask | 0-pad]
        # g_ref : (lin_pad, lout_pad) one-hot gather/placement matrix
        # out_ref: (e_pad, lout_pad)

        # Nearest-neighbor "interpolation" + batch->lane placement as one MXU
        # matmul. fp32 contract precision => exact gather.
        y = jnp.dot(x_ref[...], g_ref[...],
                    preferred_element_type=jnp.float32,
                    precision=jax.lax.Precision.HIGHEST)        # (rows, lout_pad)

        # Mask channel-sum: one sublane reduce over the bottom row group
        # (mask rows + zero padding) -> XLU slot, VPU untouched.
        m = jnp.sum(y[e_pad:, :], axis=0, keepdims=True)        # (1, lout_pad)

        # Whole-tile math; padded diff rows are zero and remain zero under
        # every embedding_type, so no row slicing / sublane concatenate.
        xd = y[:e_pad, :] * m                                    # (e_pad, lout_pad)

        if embedding_type == 'l2_norm':
            ss = jnp.sum(xd * xd, axis=0, keepdims=True)
            # torch: norm = (norm == 0) + norm ; diff = diff / norm
            # -> rsqrt (EUP) * multiply, zero-guard applied to the sum of
            #    squares so rsqrt(0)=inf never reaches the multiply.
            inv = jnp.where(ss == 0.0, 1.0, jax.lax.rsqrt(ss))
            xd = xd * inv
        elif embedding_type == 'uniform':
            xd = xd * (1.0 / float(max_size))
        else:  # 'sin'
            xd = jnp.sin(xd * (math.pi / (2.0 * float(max_size))))

        # Single full-tile, unmasked (lane-dense, sublane-aligned) store.
        out_ref[...] = xd.astype(out_ref.dtype)

    return kernel


def positional_embedding(diff, mask, *, embedding_dim=8, feature_size=8,
                         max_size=None, embedding_type='l2_norm'):
    """
    diff: (b, d, h, w)   mask: (b, mc, h, w)  (mc = 3 in the module)
    returns: (b, embedding_dim, feature_size, feature_size) float32
    """
    assert embedding_type in ('l2_norm', 'uniform', 'sin')
    if embedding_type in ('uniform', 'sin') and max_size is None:
        raise ValueError(
            f"max_size must be provided for embedding_type={embedding_type!r}")

    b, d, h, w = diff.shape
    mc = mask.shape[1]
    assert embedding_dim >= d
    fs = feature_size
    n = fs * fs
    hw = h * w

    e_pad = _round_up(embedding_dim, 8)          # output sublane-aligned rows
    rows = _round_up(e_pad + mc, 8)              # packed input rows
    lin, lout = b * hw, b * n
    lin_pad = _round_up(lin, 128)                # lane-dense input
    lout_pad = _round_up(lout, 128)              # lane-dense output (item 5)

    diff = diff.astype(jnp.float32)
    mask = mask.astype(jnp.float32)

    # Pack [diff | zeros to e_pad | mask | zeros to rows] on the channel axis,
    # then channels -> sublanes, (batch, spatial) -> lanes: one fused XLA
    # concat+transpose under jit (reshapes are free views).
    packed = jnp.concatenate([
        diff,
        jnp.zeros((b, e_pad - d, h, w), jnp.float32),
        mask,
        jnp.zeros((b, rows - e_pad - mc, h, w), jnp.float32),
    ], axis=1)                                                   # (b, rows, h, w)
    x2d = packed.reshape(b, rows, hw).transpose(1, 0, 2).reshape(rows, lin)
    if lin_pad != lin:
        x2d = jnp.pad(x2d, ((0, 0), (0, lin_pad - lin)))

    g = jnp.asarray(_gather_matrix(b, h, w, fs, lin_pad, lout_pad))

    kernel = _make_kernel(e_pad, embedding_type, max_size)

    # Single invocation (no grid): the whole problem is a few hundred KB, so
    # one VMEM block amortizes all launch/DMA overhead.
    out = pl.pallas_call(
        kernel,
        out_shape=jax.ShapeDtypeStruct((e_pad, lout_pad), jnp.float32),
        in_specs=[
            pl.BlockSpec(memory_space=pltpu.MemorySpace.VMEM),
            pl.BlockSpec(memory_space=pltpu.MemorySpace.VMEM),
        ],
        out_specs=pl.BlockSpec(memory_space=pltpu.MemorySpace.VMEM),
    )(x2d, g)

    # Back to PyTorch-style NCHW (one small fused transpose under jit).
    out = out[:embedding_dim, :lout]
    out = out.reshape(embedding_dim, b, n).transpose(1, 0, 2)
    return out.reshape(b, embedding_dim, fs, fs)


def _reference(diff, mask, *, embedding_dim, feature_size, max_size,
               embedding_type):
    """Pure-JAX reference mirroring the PyTorch forward (exact gather)."""
    b, d, h, w = diff.shape
    fs = feature_size
    idx_h = jnp.asarray(_nearest_src_indices(h, fs))
    idx_w = jnp.asarray(_nearest_src_indices(w, fs))
    di = diff.astype(jnp.float32)[:, :, idx_h, :][:, :, :, idx_w]
    ma = mask.astype(jnp.float32)[:, :, idx_h, :][:, :, :, idx_w]
    m = jnp.sum(ma, axis=1, keepdims=True)
    x = di * m
    if embedding_type == 'l2_norm':
        norm = jnp.sqrt(jnp.sum(x * x, axis=1, keepdims=True))
        norm = jnp.where(norm == 0.0, 1.0, norm)
        x = x / norm
    elif embedding_type == 'uniform':
        x = x / max_size
    else:
        x = jnp.sin(x * math.pi / (2.0 * max_size))
    if embedding_dim > d:
        pad = jnp.zeros((b, embedding_dim - d, fs, fs), dtype=x.dtype)
        x = jnp.concatenate([x, pad], axis=1)
    return x


if __name__ == "__main__":
    key = jax.random.PRNGKey(0)
    k1, k2 = jax.random.split(key)

    # Small shapes consistent with the forward contract:
    # diff (b, d, h, w), mask (b, 3, h, w); embedding_dim >= d.
    b, d, h, w = 2, 4, 16, 16
    embedding_dim, feature_size = 8, 8

    diff = jax.random.normal(k1, (b, d, h, w), dtype=jnp.float32)
    mask = (jax.random.uniform(k2, (b, 3, h, w)) > 0.5).astype(jnp.float32)

    fwd = jax.jit(
        positional_embedding,
        static_argnames=('embedding_dim', 'feature_size', 'max_size',
                         'embedding_type'))

    configs = [
        dict(max_size=None, embedding_type='l2_norm'),
        dict(max_size=10.0, embedding_type='uniform'),
        dict(max_size=10.0, embedding_type='sin'),
    ]

    for cfg in configs:
        out = fwd(diff, mask, embedding_dim=embedding_dim,
                  feature_size=feature_size, **cfg)
        out = jax.block_until_ready(out)

        ref = _reference(diff, mask, embedding_dim=embedding_dim,
                         feature_size=feature_size, **cfg)

        assert out.shape == (b, embedding_dim, feature_size, feature_size)
        assert jnp.allclose(out, ref, atol=1e-5, rtol=1e-5), cfg

    print("KERNEL_OK")
</pallas_src>

<mosaic_0001>
module attributes {stable_mosaic.version = 11 : i64} {
  func.func @kernel(%arg0: memref<16x512xf32, #tpu.memory_space<vmem>>, %arg1: memref<512x128xf32, #tpu.memory_space<vmem>>, %arg2: memref<8x128xf32, #tpu.memory_space<vmem>>) attributes {dimension_semantics = [], scalar_prefetch = 0 : i64, scratch_operands = 0 : i64, tpu.core_type = #tpu.core_type<tc>} {
    %c0 = arith.constant 0 : index
    %c0_0 = arith.constant 0 : index
    %0 = vector.load %arg0[%c0, %c0_0] : memref<16x512xf32, #tpu.memory_space<vmem>>, vector<16x512xf32>
    %c0_1 = arith.constant 0 : index
    %c0_2 = arith.constant 0 : index
    %1 = vector.load %arg1[%c0_1, %c0_2] : memref<512x128xf32, #tpu.memory_space<vmem>>, vector<512x128xf32>
    %cst = arith.constant dense<0.000000e+00> : vector<16x128xf32>
    %2 = tpu.matmul %0, %1, %cst {dimension_numbers = #tpu.dot_dimension_numbers<[1], [0], [0], [1], [0, 0, 1, 1], [], []>, precision = #tpu.contract_precision<fp32>} : vector<16x512xf32>, vector<512x128xf32>, vector<16x128xf32> -> vector<16x128xf32>
    %3 = vector.extract_strided_slice %2 {offsets = [8, 0], sizes = [8, 128], strides = [1, 1]} : vector<16x128xf32> to vector<8x128xf32>
    %cst_3 = arith.constant dense<0.000000e+00> : vector<128xf32>
    %4 = vector.multi_reduction <add>, %3, %cst_3 [0] : vector<8x128xf32> to vector<128xf32>
    %5 = vector.shape_cast %4 : vector<128xf32> to vector<1x128xf32>
    %6 = vector.extract_strided_slice %2 {offsets = [0, 0], sizes = [8, 128], strides = [1, 1]} : vector<16x128xf32> to vector<8x128xf32>
    %7 = vector.broadcast %5 : vector<1x128xf32> to vector<8x128xf32>
    %8 = arith.mulf %6, %7 : vector<8x128xf32>
    %9 = arith.mulf %8, %8 : vector<8x128xf32>
    %cst_4 = arith.constant dense<0.000000e+00> : vector<128xf32>
    %10 = vector.multi_reduction <add>, %9, %cst_4 [0] : vector<8x128xf32> to vector<128xf32>
    %11 = vector.shape_cast %10 : vector<128xf32> to vector<1x128xf32>
    %cst_5 = arith.constant 0.000000e+00 : f32
    %12 = vector.broadcast %cst_5 : f32 to vector<1x128xf32>
    %13 = arith.cmpf oeq, %11, %12 : vector<1x128xf32>
    %14 = math.rsqrt %11 : vector<1x128xf32>
    %cst_6 = arith.constant 1.000000e+00 : f32
    %15 = vector.broadcast %cst_6 : f32 to vector<1x128xf32>
    %16 = arith.select %13, %15, %14 : vector<1x128xi1>, vector<1x128xf32>
    %17 = vector.broadcast %16 : vector<1x128xf32> to vector<8x128xf32>
    %18 = arith.mulf %8, %17 : vector<8x128xf32>
    %c0_7 = arith.constant 0 : index
    %c0_8 = arith.constant 0 : index
    %19 = vector.load %arg2[%c0_7, %c0_8] : memref<8x128xf32, #tpu.memory_space<vmem>>, vector<8x128xf32>
    tpu.vector_store %arg2[%c0_7, %c0_8], %18 {strides = array<i32>} : memref<8x128xf32, #tpu.memory_space<vmem>>, vector<8x128xf32>,
    return
  }
}

</mosaic_0001>

<llo_original>
// kernel: positional_embedding.1
$region0: #{positional_embedding.1}
  #allocation0 [shape = 'u32[]', space=smem, size = 0x4, offset = 0x4, fixed_abs, tag = 'smem constant byte address 0x4 - core index']
  #allocation1 [shape = 'u32[144,128]{1,0:T(1,128)}', space=vmem, size = 0x12000, scoped, tag = 'internal scratch']
  %s0 = inlined_call_operand.vmem [shape: f32[16,512], index: 0, kind: input, shape index: {}]
  %s1 = inlined_call_operand.vmem [shape: f32[512,128], index: 1, kind: input, shape index: {}]
  %s2 = inlined_call_operand.vmem [shape: f32[8,128], index: 2, kind: output, shape index: {}]
  %s3 = sld [smem:[#allocation0]]
  $region18: #{positional_embedding.1} parent=0
    _
  %s5 = ssub.s32 1, %s3
  %s6 = scalar_select 0, %s5, %s3
  // Predicated region
  $region2: #{positional_embedding.1} parent=0 // pred_check
    _
  $region3: #{positional_embedding.1} parent=0 // pred_check_branch
    %8 = sbr.rel (0) target = $region5
  $region4: #{positional_embedding.1} parent=0 // pred_region
    _
  $region5: #{positional_embedding.1} parent=0 // pred_fallthru
    _
  // Predicated region
  $region6: #{positional_embedding.1} parent=0 // pred_check
    _
  $region7: #{positional_embedding.1} parent=0 // pred_check_branch
    %10 = sbr.rel (0) target = $region9
  $region8: #{positional_embedding.1} parent=0 // pred_region
    _
  $region9: #{positional_embedding.1} parent=0 // pred_fallthru
    _
  %v11 = vld [vmem:[%s0] sm:$0xff]
  %v12 = vld [vmem:[%s0 + $0x8] sm:$0xff]
  %v13 = vld [vmem:[%s0 + $0x10] sm:$0xff]
  %v14 = vld [vmem:[%s0 + $0x18] sm:$0xff]
  %v15 = vld [vmem:[%s0 + $0x20] sm:$0xff]
  %v16 = vld [vmem:[%s0 + $0x28] sm:$0xff]
  %v17 = vld [vmem:[%s0 + $0x30] sm:$0xff]
  %v18 = vld [vmem:[%s0 + $0x38] sm:$0xff]
  %v19 = vld [vmem:[%s1] sm:$0xff]
  %v20 = vld [vmem:[%s1 + $0x8] sm:$0xff]
  %v21 = vld [vmem:[%s1 + $0x10] sm:$0xff]
  %v22 = vld [vmem:[%s1 + $0x18] sm:$0xff]
  %v23 = vld [vmem:[%s1 + $0x20] sm:$0xff]
  %v24 = vld [vmem:[%s1 + $0x28] sm:$0xff]
  %v25 = vld [vmem:[%s1 + $0x30] sm:$0xff]
  %v26 = vld [vmem:[%s1 + $0x38] sm:$0xff]
  %v27 = vld [vmem:[%s1 + $0x40] sm:$0xff]
  %v28 = vld [vmem:[%s1 + $0x48] sm:$0xff]
  %v29 = vld [vmem:[%s1 + $0x50] sm:$0xff]
  %v30 = vld [vmem:[%s1 + $0x58] sm:$0xff]
  %v31 = vld [vmem:[%s1 + $0x60] sm:$0xff]
  %v32 = vld [vmem:[%s1 + $0x68] sm:$0xff]
  %v33 = vld [vmem:[%s1 + $0x70] sm:$0xff]
  %v34 = vld [vmem:[%s1 + $0x78] sm:$0xff]
  %v35 = vld [vmem:[%s1 + $0x80] sm:$0xff]
  %v36 = vld [vmem:[%s1 + $0x88] sm:$0xff]
  %v37 = vld [vmem:[%s1 + $0x90] sm:$0xff]
  %v38 = vld [vmem:[%s1 + $0x98] sm:$0xff]
  %v39 = vld [vmem:[%s1 + $0xa0] sm:$0xff]
  %v40 = vld [vmem:[%s1 + $0xa8] sm:$0xff]
  %v41 = vld [vmem:[%s1 + $0xb0] sm:$0xff]
  %v42 = vld [vmem:[%s1 + $0xb8] sm:$0xff]
  %v43 = vld [vmem:[%s1 + $0xc0] sm:$0xff]
  %v44 = vld [vmem:[%s1 + $0xc8] sm:$0xff]
  %v45 = vld [vmem:[%s1 + $0xd0] sm:$0xff]
  %v46 = vld [vmem:[%s1 + $0xd8] sm:$0xff]
  %v47 = vld [vmem:[%s1 + $0xe0] sm:$0xff]
  %v48 = vld [vmem:[%s1 + $0xe8] sm:$0xff]
  %v49 = vld [vmem:[%s1 + $0xf0] sm:$0xff]
  %v50 = vld [vmem:[%s1 + $0xf8] sm:$0xff]
  %v51 = vld [vmem:[%s1 + $0x100] sm:$0xff]
  %v52 = vld [vmem:[%s1 + $0x108] sm:$0xff]
  %v53 = vld [vmem:[%s1 + $0x110] sm:$0xff]
  %v54 = vld [vmem:[%s1 + $0x118] sm:$0xff]
  %v55 = vld [vmem:[%s1 + $0x120] sm:$0xff]
  %v56 = vld [vmem:[%s1 + $0x128] sm:$0xff]
  %v57 = vld [vmem:[%s1 + $0x130] sm:$0xff]
  %v58 = vld [vmem:[%s1 + $0x138] sm:$0xff]
  %v59 = vld [vmem:[%s1 + $0x140] sm:$0xff]
  %v60 = vld [vmem:[%s1 + $0x148] sm:$0xff]
  %v61 = vld [vmem:[%s1 + $0x150] sm:$0xff]
  %v62 = vld [vmem:[%s1 + $0x158] sm:$0xff]
  %v63 = vld [vmem:[%s1 + $0x160] sm:$0xff]
  %v64 = vld [vmem:[%s1 + $0x168] sm:$0xff]
  %v65 = vld [vmem:[%s1 + $0x170] sm:$0xff]
  %v66 = vld [vmem:[%s1 + $0x178] sm:$0xff]
  %v67 = vld [vmem:[%s1 + $0x180] sm:$0xff]
  %v68 = vld [vmem:[%s1 + $0x188] sm:$0xff]
  %v69 = vld [vmem:[%s1 + $0x190] sm:$0xff]
  %v70 = vld [vmem:[%s1 + $0x198] sm:$0xff]
  %v71 = vld [vmem:[%s1 + $0x1a0] sm:$0xff]
  %v72 = vld [vmem:[%s1 + $0x1a8] sm:$0xff]
  %v73 = vld [vmem:[%s1 + $0x1b0] sm:$0xff]
  %v74 = vld [vmem:[%s1 + $0x1b8] sm:$0xff]
  %v75 = vld [vmem:[%s1 + $0x1c0] sm:$0xff]
  %v76 = vld [vmem:[%s1 + $0x1c8] sm:$0xff]
  %v77 = vld [vmem:[%s1 + $0x1d0] sm:$0xff]
  %v78 = vld [vmem:[%s1 + $0x1d8] sm:$0xff]
  %v79 = vld [vmem:[%s1 + $0x1e0] sm:$0xff]
  %v80 = vld [vmem:[%s1 + $0x1e8] sm:$0xff]
  %v81 = vld [vmem:[%s1 + $0x1f0] sm:$0xff]
  %v82 = vld [vmem:[%s1 + $0x1f8] sm:$0xff]
  %83 = vmatprep.subr.mxu0 0.0
  %v84 = vand.u32 %v19, 4294901760
  %85 = vmatpush1.msra.mxu0 %v84
  %86 = vmatprep.subr.mxu0 0.0
  %v87 = vand.u32 %v20, 4294901760
  %88 = vmatpush1.msra.mxu0 %v87
  %89 = vmatprep.subr.mxu0 0.0
  %v90 = vand.u32 %v21, 4294901760
  %91 = vmatpush1.msra.mxu0 %v90
  %92 = vmatprep.subr.mxu0 0.0
  %v93 = vand.u32 %v22, 4294901760
  %94 = vmatpush1.msra.mxu0 %v93
  %95 = vmatprep.subr.mxu0 0.0
  %v96 = vand.u32 %v23, 4294901760
  %97 = vmatpush1.msra.mxu0 %v96
  %98 = vmatprep.subr.mxu0 0.0
  %v99 = vand.u32 %v24, 4294901760
  %100 = vmatpush1.msra.mxu0 %v99
  %101 = vmatprep.subr.mxu0 0.0
  %v102 = vand.u32 %v25, 4294901760
  %103 = vmatpush1.msra.mxu0 %v102
  %104 = vmatprep.subr.mxu0 0.0
  %v105 = vand.u32 %v26, 4294901760
  %106 = vmatpush1.msra.mxu0 %v105
  %107 = vmatprep.subr.mxu0 0.0
  %v108 = vand.u32 %v27, 4294901760
  %109 = vmatpush1.msra.mxu0 %v108
  %110 = vmatprep.subr.mxu0 0.0
  %v111 = vand.u32 %v28, 4294901760
  %112 = vmatpush1.msra.mxu0 %v111
  %113 = vmatprep.subr.mxu0 0.0
  %v114 = vand.u32 %v29, 4294901760
  %115 = vmatpush1.msra.mxu0 %v114
  %116 = vmatprep.subr.mxu0 0.0
  %v117 = vand.u32 %v30, 4294901760
  %118 = vmatpush1.msra.mxu0 %v117
  %119 = vmatprep.subr.mxu0 0.0
  %v120 = vand.u32 %v31, 4294901760
  %121 = vmatpush1.msra.mxu0 %v120
  %122 = vmatprep.subr.mxu0 0.0
  %v123 = vand.u32 %v32, 4294901760
  %124 = vmatpush1.msra.mxu0 %v123
  %125 = vmatprep.subr.mxu0 0.0
  %v126 = vand.u32 %v33, 4294901760
  %127 = vmatpush1.msra.mxu0 %v126
  %128 = vmatprep.subr.mxu0 0.0
  %v129 = vand.u32 %v34, 4294901760
  %130 = vmatpush1.msra.mxu0 %v129
  %131 = vmatprep.subr.mxu0 0.0
  %v132 = vand.u32 %v35, 4294901760
  %133 = vmatpush1.msra.mxu0 %v132
  %134 = vmatprep.subr.mxu0 0.0
  %v135 = vand.u32 %v36, 4294901760
  %136 = vmatpush1.msra.mxu0 %v135
  %137 = vmatprep.subr.mxu0 0.0
  %v138 = vand.u32 %v37, 4294901760
  %139 = vmatpush1.msra.mxu0 %v138
  %140 = vmatprep.subr.mxu0 0.0
  %v141 = vand.u32 %v38, 4294901760
  %142 = vmatpush1.msra.mxu0 %v141
  %143 = vmatprep.subr.mxu0 0.0
  %v144 = vand.u32 %v39, 4294901760
  %145 = vmatpush1.msra.mxu0 %v144
  %146 = vmatprep.subr.mxu0 0.0
  %v147 = vand.u32 %v40, 4294901760
  %148 = vmatpush1.msra.mxu0 %v147
  %149 = vmatprep.subr.mxu0 0.0
  %v150 = vand.u32 %v41, 4294901760
  %151 = vmatpush1.msra.mxu0 %v150
  %152 = vmatprep.subr.mxu0 0.0
  %v153 = vand.u32 %v42, 4294901760
  %154 = vmatpush1.msra.mxu0 %v153
  %155 = vmatprep.subr.mxu0 0.0
  %v156 = vand.u32 %v43, 4294901760
  %157 = vmatpush1.msra.mxu0 %v156
  %158 = vmatprep.subr.mxu0 0.0
  %v159 = vand.u32 %v44, 4294901760
  %160 = vmatpush1.msra.mxu0 %v159
  %161 = vmatprep.subr.mxu0 0.0
  %v162 = vand.u32 %v45, 4294901760
  %163 = vmatpush1.msra.mxu0 %v162
  %164 = vmatprep.subr.mxu0 0.0
  %v165 = vand.u32 %v46, 4294901760
  %166 = vmatpush1.msra.mxu0 %v165
  %167 = vmatprep.subr.mxu0 0.0
  %v168 = vand.u32 %v47, 4294901760
  %169 = vmatpush1.msra.mxu0 %v168
  %170 = vmatprep.subr.mxu0 0.0
  %v171 = vand.u32 %v48, 4294901760
  %172 = vmatpush1.msra.mxu0 %v171
  %173 = vmatprep.subr.mxu0 0.0
  %v174 = vand.u32 %v49, 4294901760
  %175 = vmatpush1.msra.mxu0 %v174
  %176 = vmatprep.subr.mxu0 0.0
  %v177 = vand.u32 %v50, 4294901760
  %178 = vmatpush1.msra.mxu0 %v177
  %v179 = vand.u32 %v12, 4294901760
  %v180 = vsub.f32 %v12, %v179
  %v181 = vand.u32 %v180, 4294901760
  %v182 = vsub.f32 %v180, %v181
  %v183 = vand.u32 %v182, 4294901760
  %184 = vmatprep.mubr.f32.mxu0 %v183
  %v185 = vand.u32 %v11, 4294901760
  %v186 = vsub.f32 %v11, %v185
  %v187 = vand.u32 %v186, 4294901760
  %v188 = vsub.f32 %v186, %v187
  %v189 = vand.u32 %v188, 4294901760
  %190 = vmatmul.mubr.f32.gmra.mrb[0].mxu0 %v189
  %v191 = vpop.f32.mrb[0].mxu0
  %v192 = vadd.f32 0.0, %v191
  %v193 = vpop.f32.mrb[0].mxu0
  %v194 = vand.u32 %v16, 4294901760
  %v195 = vsub.f32 %v16, %v194
  %v196 = vand.u32 %v195, 4294901760
  %v197 = vsub.f32 %v195, %v196
  %v198 = vand.u32 %v197, 4294901760
  %199 = vmatprep.mubr.f32.mxu0 %v198
  %v200 = vand.u32 %v15, 4294901760
  %v201 = vsub.f32 %v15, %v200
  %v202 = vand.u32 %v201, 4294901760
  %v203 = vsub.f32 %v201, %v202
  %v204 = vand.u32 %v203, 4294901760
  %205 = vmatmul.mubr.f32.gmra.mrb[0].mxu0 %v204
  %v206 = vpop.f32.mrb[0].mxu0
  %v207 = vadd.f32 0.0, %v206
  %v208 = vpop.f32.mrb[0].mxu0
  %209 = vdwg.mxu0
  %210 = vmatprep.subr.mxu0 0.0
  %v211 = vand.u32 %v19, 4294901760
  %v212 = vsub.f32 %v19, %v211
  %v213 = vand.u32 %v212, 4294901760
  %v214 = vsub.f32 %v212, %v213
  %v215 = vand.u32 %v214, 4294901760
  %216 = vmatpush1.msra.mxu0 %v215
  %217 = vmatprep.subr.mxu0 0.0
  %v218 = vand.u32 %v20, 4294901760
  %v219 = vsub.f32 %v20, %v218
  %v220 = vand.u32 %v219, 4294901760
  %v221 = vsub.f32 %v219, %v220
  %v222 = vand.u32 %v221, 4294901760
  %223 = vmatpush1.msra.mxu0 %v222
  %224 = vmatprep.subr.mxu0 0.0
  %v225 = vand.u32 %v21, 4294901760
  %v226 = vsub.f32 %v21, %v225
  %v227 = vand.u32 %v226, 4294901760
  %v228 = vsub.f32 %v226, %v227
  %v229 = vand.u32 %v228, 4294901760
  %230 = vmatpush1.msra.mxu0 %v229
  %231 = vmatprep.subr.mxu0 0.0
  %v232 = vand.u32 %v22, 4294901760
  %v233 = vsub.f32 %v22, %v232
  %v234 = vand.u32 %v233, 4294901760
  %v235 = vsub.f32 %v233, %v234
  %v236 = vand.u32 %v235, 4294901760
  %237 = vmatpush1.msra.mxu0 %v236
  %238 = vmatprep.subr.mxu0 0.0
  %v239 = vand.u32 %v23, 4294901760
  %v240 = vsub.f32 %v23, %v239
  %v241 = vand.u32 %v240, 4294901760
  %v242 = vsub.f32 %v240, %v241
  %v243 = vand.u32 %v242, 4294901760
  %244 = vmatpush1.msra.mxu0 %v243
  %245 = vmatprep.subr.mxu0 0.0
  %v246 = vand.u32 %v24, 4294901760
  %v247 = vsub.f32 %v24, %v246
  %v248 = vand.u32 %v247, 4294901760
  %v249 = vsub.f32 %v247, %v248
  %v250 = vand.u32 %v249, 4294901760
  %251 = vmatpush1.msra.mxu0 %v250
  %252 = vmatprep.subr.mxu0 0.0
  %v253 = vand.u32 %v25, 4294901760
  %v254 = vsub.f32 %v25, %v253
  %v255 = vand.u32 %v254, 4294901760
  %v256 = vsub.f32 %v254, %v255
  %v257 = vand.u32 %v256, 4294901760
  %258 = vmatpush1.msra.mxu0 %v257
  %259 = vmatprep.subr.mxu0 0.0
  %v260 = vand.u32 %v26, 4294901760
  %v261 = vsub.f32 %v26, %v260
  %v262 = vand.u32 %v261, 4294901760
  %v263 = vsub.f32 %v261, %v262
  %v264 = vand.u32 %v263, 4294901760
  %265 = vmatpush1.msra.mxu0 %v264
  %266 = vmatprep.subr.mxu0 0.0
  %v267 = vand.u32 %v27, 4294901760
  %v268 = vsub.f32 %v27, %v267
  %v269 = vand.u32 %v268, 4294901760
  %v270 = vsub.f32 %v268, %v269
  %v271 = vand.u32 %v270, 4294901760
  %272 = vmatpush1.msra.mxu0 %v271
  %273 = vmatprep.subr.mxu0 0.0
  %v274 = vand.u32 %v28, 4294901760
  %v275 = vsub.f32 %v28, %v274
  %v276 = vand.u32 %v275, 4294901760
  %v277 = vsub.f32 %v275, %v276
  %v278 = vand.u32 %v277, 4294901760
  %279 = vmatpush1.msra.mxu0 %v278
  %280 = vmatprep.subr.mxu0 0.0
  %v281 = vand.u32 %v29, 4294901760
  %v282 = vsub.f32 %v29, %v281
  %v283 = vand.u32 %v282, 4294901760
  %v284 = vsub.f32 %v282, %v283
  %v285 = vand.u32 %v284, 4294901760
  %286 = vmatpush1.msra.mxu0 %v285
  %287 = vmatprep.subr.mxu0 0.0
  %v288 = vand.u32 %v30, 4294901760
  %v289 = vsub.f32 %v30, %v288
  %v290 = vand.u32 %v289, 4294901760
  %v291 = vsub.f32 %v289, %v290
  %v292 = vand.u32 %v291, 4294901760
  %293 = vmatpush1.msra.mxu0 %v292
  %294 = vmatprep.subr.mxu0 0.0
  %v295 = vand.u32 %v31, 4294901760
  %v296 = vsub.f32 %v31, %v295
  %v297 = vand.u32 %v296, 4294901760
  %v298 = vsub.f32 %v296, %v297
  %v299 = vand.u32 %v298, 4294901760
  %300 = vmatpush1.msra.mxu0 %v299
  %301 = vmatprep.subr.mxu0 0.0
  %v302 = vand.u32 %v32, 4294901760
  %v303 = vsub.f32 %v32, %v302
  %v304 = vand.u32 %v303, 4294901760
  %v305 = vsub.f32 %v303, %v304
  %v306 = vand.u32 %v305, 4294901760
  %307 = vmatpush1.msra.mxu0 %v306
  %308 = vmatprep.subr.mxu0 0.0
  %v309 = vand.u32 %v33, 4294901760
  %v310 = vsub.f32 %v33, %v309
  %v311 = vand.u32 %v310, 4294901760
  %v312 = vsub.f32 %v310, %v311
  %v313 = vand.u32 %v312, 4294901760
  %314 = vmatpush1.msra.mxu0 %v313
  %315 = vmatprep.subr.mxu0 0.0
  %v316 = vand.u32 %v34, 4294901760
  %v317 = vsub.f32 %v34, %v316
  %v318 = vand.u32 %v317, 4294901760
  %v319 = vsub.f32 %v317, %v318
  %v320 = vand.u32 %v319, 4294901760
  %321 = vmatpush1.msra.mxu0 %v320
  %322 = vmatprep.subr.mxu0 0.0
  %v323 = vand.u32 %v35, 4294901760
  %v324 = vsub.f32 %v35, %v323
  %v325 = vand.u32 %v324, 4294901760
  %v326 = vsub.f32 %v324, %v325
  %v327 = vand.u32 %v326, 4294901760
  %328 = vmatpush1.msra.mxu0 %v327
  %329 = vmatprep.subr.mxu0 0.0
  %v330 = vand.u32 %v36, 4294901760
  %v331 = vsub.f32 %v36, %v330
  %v332 = vand.u32 %v331, 4294901760
  %v333 = vsub.f32 %v331, %v332
  %v334 = vand.u32 %v333, 4294901760
  %335 = vmatpush1.msra.mxu0 %v334
  %336 = vmatprep.subr.mxu0 0.0
  %v337 = vand.u32 %v37, 4294901760
  %v338 = vsub.f32 %v37, %v337
  %v339 = vand.u32 %v338, 4294901760
  %v340 = vsub.f32 %v338, %v339
  %v341 = vand.u32 %v340, 4294901760
  %342 = vmatpush1.msra.mxu0 %v341
  %343 = vmatprep.subr.mxu0 0.0
  %v344 = vand.u32 %v38, 4294901760
  %v345 = vsub.f32 %v38, %v344
  %v346 = vand.u32 %v345, 4294901760
  %v347 = vsub.f32 %v345, %v346
  %v348 = vand.u32 %v347, 4294901760
  %349 = vmatpush1.msra.mxu0 %v348
  %350 = vmatprep.subr.mxu0 0.0
  %v351 = vand.u32 %v39, 4294901760
  %v352 = vsub.f32 %v39, %v351
  %v353 = vand.u32 %v352, 4294901760
  %v354 = vsub.f32 %v352, %v353
  %v355 = vand.u32 %v354, 4294901760
  %356 = vmatpush1.msra.mxu0 %v355
  %357 = vmatprep.subr.mxu0 0.0
  %v358 = vand.u32 %v40, 4294901760
  %v359 = vsub.f32 %v40, %v358
  %v360 = vand.u32 %v359, 4294901760
  %v361 = vsub.f32 %v359, %v360
  %v362 = vand.u32 %v361, 4294901760
  %363 = vmatpush1.msra.mxu0 %v362
  %364 = vmatprep.subr.mxu0 0.0
  %v365 = vand.u32 %v41, 4294901760
  %v366 = vsub.f32 %v41, %v365
  %v367 = vand.u32 %v366, 4294901760
  %v368 = vsub.f32 %v366, %v367
  %v369 = vand.u32 %v368, 4294901760
  %370 = vmatpush1.msra.mxu0 %v369
  %371 = vmatprep.subr.mxu0 0.0
  %v372 = vand.u32 %v42, 4294901760
  %v373 = vsub.f32 %v42, %v372
  %v374 = vand.u32 %v373, 4294901760
  %v375 = vsub.f32 %v373, %v374
  %v376 = vand.u32 %v375, 4294901760
  %377 = vmatpush1.msra.mxu0 %v376
  %378 = vmatprep.subr.mxu0 0.0
  %v379 = vand.u32 %v43, 4294901760
  %v380 = vsub.f32 %v43, %v379
  %v381 = vand.u32 %v380, 4294901760
  %v382 = vsub.f32 %v380, %v381
  %v383 = vand.u32 %v382, 4294901760
  %384 = vmatpush1.msra.mxu0 %v383
  %385 = vmatprep.subr.mxu0 0.0
  %v386 = vand.u32 %v44, 4294901760
  %v387 = vsub.f32 %v44, %v386
  %v388 = vand.u32 %v387, 4294901760
  %v389 = vsub.f32 %v387, %v388
  %v390 = vand.u32 %v389, 4294901760
  %391 = vmatpush1.msra.mxu0 %v390
  %392 = vmatprep.subr.mxu0 0.0
  %v393 = vand.u32 %v45, 4294901760
  %v394 = vsub.f32 %v45, %v393
  %v395 = vand.u32 %v394, 4294901760
  %v396 = vsub.f32 %v394, %v395
  %v397 = vand.u32 %v396, 4294901760
  %398 = vmatpush1.msra.mxu0 %v397
  %399 = vmatprep.subr.mxu0 0.0
  %v400 = vand.u32 %v46, 4294901760
  %v401 = vsub.f32 %v46, %v400
  %v402 = vand.u32 %v401, 4294901760
  %v403 = vsub.f32 %v401, %v402
  %v404 = vand.u32 %v403, 4294901760
  %405 = vmatpush1.msra.mxu0 %v404
  %406 = vmatprep.subr.mxu0 0.0
  %v407 = vand.u32 %v47, 4294901760
  %v408 = vsub.f32 %v47, %v407
  %v409 = vand.u32 %v408, 4294901760
  %v410 = vsub.f32 %v408, %v409
  %v411 = vand.u32 %v410, 4294901760
  %412 = vmatpush1.msra.mxu0 %v411
  %413 = vmatprep.subr.mxu0 0.0
  %v414 = vand.u32 %v48, 4294901760
  %v415 = vsub.f32 %v48, %v414
  %v416 = vand.u32 %v415, 4294901760
  %v417 = vsub.f32 %v415, %v416
  %v418 = vand.u32 %v417, 4294901760
  %419 = vmatpush1.msra.mxu0 %v418
  %420 = vmatprep.subr.mxu0 0.0
  %v421 = vand.u32 %v49, 4294901760
  %v422 = vsub.f32 %v49, %v421
  %v423 = vand.u32 %v422, 4294901760
  %v424 = vsub.f32 %v422, %v423
  %v425 = vand.u32 %v424, 4294901760
  %426 = vmatpush1.msra.mxu0 %v425
  %427 = vmatprep.subr.mxu0 0.0
  %v428 = vand.u32 %v50, 4294901760
  %v429 = vsub.f32 %v50, %v428
  %v430 = vand.u32 %v429, 4294901760
  %v431 = vsub.f32 %v429, %v430
  %v432 = vand.u32 %v431, 4294901760
  %433 = vmatpush1.msra.mxu0 %v432
  %v434 = vand.u32 %v12, 4294901760
  %435 = vmatprep.mubr.f32.mxu0 %v434
  %v436 = vand.u32 %v11, 4294901760
  %437 = vmatmul.mubr.f32.gmra.mrb[0].mxu0 %v436
  %v438 = vpop.f32.mrb[0].mxu0
  %v439 = vadd.f32 %v192, %v438
  %v440 = vpop.f32.mrb[0].mxu0
  %v441 = vand.u32 %v16, 4294901760
  %442 = vmatprep.mubr.f32.mxu0 %v441
  %v443 = vand.u32 %v15, 4294901760
  %444 = vmatmul.mubr.f32.gmra.mrb[0].mxu0 %v443
  %v445 = vpop.f32.mrb[0].mxu0
  %v446 = vadd.f32 %v207, %v445
  %v447 = vpop.f32.mrb[0].mxu0
  %448 = vdwg.mxu0
  %449 = vmatprep.subr.mxu0 0.0
  %v450 = vand.u32 %v19, 4294901760
  %v451 = vsub.f32 %v19, %v450
  %452 = vmatpush1.msra.mxu0 %v451
  %453 = vmatprep.subr.mxu0 0.0
  %v454 = vand.u32 %v20, 4294901760
  %v455 = vsub.f32 %v20, %v454
  %456 = vmatpush1.msra.mxu0 %v455
  %457 = vmatprep.subr.mxu0 0.0
  %v458 = vand.u32 %v21, 4294901760
  %v459 = vsub.f32 %v21, %v458
  %460 = vmatpush1.msra.mxu0 %v459
  %461 = vmatprep.subr.mxu0 0.0
  %v462 = vand.u32 %v22, 4294901760
  %v463 = vsub.f32 %v22, %v462
  %464 = vmatpush1.msra.mxu0 %v463
  %465 = vmatprep.subr.mxu0 0.0
  %v466 = vand.u32 %v23, 4294901760
  %v467 = vsub.f32 %v23, %v466
  %468 = vmatpush1.msra.mxu0 %v467
  %469 = vmatprep.subr.mxu0 0.0
  %v470 = vand.u32 %v24, 4294901760
  %v471 = vsub.f32 %v24, %v470
  %472 = vmatpush1.msra.mxu0 %v471
  %473 = vmatprep.subr.mxu0 0.0
  %v474 = vand.u32 %v25, 4294901760
  %v475 = vsub.f32 %v25, %v474
  %476 = vmatpush1.msra.mxu0 %v475
  %477 = vmatprep.subr.mxu0 0.0
  %v478 = vand.u32 %v26, 4294901760
  %v479 = vsub.f32 %v26, %v478
  %480 = vmatpush1.msra.mxu0 %v479
  %481 = vmatprep.subr.mxu0 0.0
  %v482 = vand.u32 %v27, 4294901760
  %v483 = vsub.f32 %v27, %v482
  %484 = vmatpush1.msra.mxu0 %v483
  %485 = vmatprep.subr.mxu0 0.0
  %v486 = vand.u32 %v28, 4294901760
  %v487 = vsub.f32 %v28, %v486
  %488 = vmatpush1.msra.mxu0 %v487
  %489 = vmatprep.subr.mxu0 0.0
  %v490 = vand.u32 %v29, 4294901760
  %v491 = vsub.f32 %v29, %v490
  %492 = vmatpush1.msra.mxu0 %v491
  %493 = vmatprep.subr.mxu0 0.0
  %v494 = vand.u32 %v30, 4294901760
  %v495 = vsub.f32 %v30, %v494
  %496 = vmatpush1.msra.mxu0 %v495
  %497 = vmatprep.subr.mxu0 0.0
  %v498 = vand.u32 %v31, 4294901760
  %v499 = vsub.f32 %v31, %v498
  %500 = vmatpush1.msra.mxu0 %v499
  %501 = vmatprep.subr.mxu0 0.0
  %v502 = vand.u32 %v32, 4294901760
  %v503 = vsub.f32 %v32, %v502
  %504 = vmatpush1.msra.mxu0 %v503
  %505 = vmatprep.subr.mxu0 0.0
  %v506 = vand.u32 %v33, 4294901760
  %v507 = vsub.f32 %v33, %v506
  %508 = vmatpush1.msra.mxu0 %v507
  %509 = vmatprep.subr.mxu0 0.0
  %v510 = vand.u32 %v34, 4294901760
  %v511 = vsub.f32 %v34, %v510
  %512 = vmatpush1.msra.mxu0 %v511
  %513 = vmatprep.subr.mxu0 0.0
  %v514 = vand.u32 %v35, 4294901760
  %v515 = vsub.f32 %v35, %v514
  %516 = vmatpush1.msra.mxu0 %v515
  %517 = vmatprep.subr.mxu0 0.0
  %v518 = vand.u32 %v36, 4294901760
  %v519 = vsub.f32 %v36, %v518
  %520 = vmatpush1.msra.mxu0 %v519
  %521 = vmatprep.subr.mxu0 0.0
  %v522 = vand.u32 %v37, 4294901760
  %v523 = vsub.f32 %v37, %v522
  %524 = vmatpush1.msra.mxu0 %v523
  %525 = vmatprep.subr.mxu0 0.0
  %v526 = vand.u32 %v38, 4294901760
  %v527 = vsub.f32 %v38, %v526
  %528 = vmatpush1.msra.mxu0 %v527
  %529 = vmatprep.subr.mxu0 0.0
  %v530 = vand.u32 %v39, 4294901760
  %v531 = vsub.f32 %v39, %v530
  %532 = vmatpush1.msra.mxu0 %v531
  %533 = vmatprep.subr.mxu0 0.0
  %v534 = vand.u32 %v40, 4294901760
  %v535 = vsub.f32 %v40, %v534
  %536 = vmatpush1.msra.mxu0 %v535
  %537 = vmatprep.subr.mxu0 0.0
  %v538 = vand.u32 %v41, 4294901760
  %v539 = vsub.f32 %v41, %v538
  %540 = vmatpush1.msra.mxu0 %v539
  %541 = vmatprep.subr.mxu0 0.0
  %v542 = vand.u32 %v42, 4294901760
  %v543 = vsub.f32 %v42, %v542
  %544 = vmatpush1.msra.mxu0 %v543
  %545 = vmatprep.subr.mxu0 0.0
  %v546 = vand.u32 %v43, 4294901760
  %v547 = vsub.f32 %v43, %v546
  %548 = vmatpush1.msra.mxu0 %v547
  %549 = vmatprep.subr.mxu0 0.0
  %v550 = vand.u32 %v44, 4294901760
  %v551 = vsub.f32 %v44, %v550
  %552 = vmatpush1.msra.mxu0 %v551
  %553 = vmatprep.subr.mxu0 0.0
  %v554 = vand.u32 %v45, 4294901760
  %v555 = vsub.f32 %v45, %v554
  %556 = vmatpush1.msra.mxu0 %v555
  %557 = vmatprep.subr.mxu0 0.0
  %v558 = vand.u32 %v46, 4294901760
  %v559 = vsub.f32 %v46, %v558
  %560 = vmatpush1.msra.mxu0 %v559
  %561 = vmatprep.subr.mxu0 0.0
  %v562 = vand.u32 %v47, 4294901760
  %v563 = vsub.f32 %v47, %v562
  %564 = vmatpush1.msra.mxu0 %v563
  %565 = vmatprep.subr.mxu0 0.0
  %v566 = vand.u32 %v48, 4294901760
  %v567 = vsub.f32 %v48, %v566
  %568 = vmatpush1.msra.mxu0 %v567
  %569 = vmatprep.subr.mxu0 0.0
  %v570 = vand.u32 %v49, 4294901760
  %v571 = vsub.f32 %v49, %v570
  %572 = vmatpush1.msra.mxu0 %v571
  %573 = vmatprep.subr.mxu0 0.0
  %v574 = vand.u32 %v50, 4294901760
  %v575 = vsub.f32 %v50, %v574
  %576 = vmatpush1.msra.mxu0 %v575
  %v577 = vand.u32 %v12, 4294901760
  %v578 = vsub.f32 %v12, %v577
  %579 = vmatprep.mubr.f32.mxu0 %v578
  %v580 = vand.u32 %v11, 4294901760
  %v581 = vsub.f32 %v11, %v580
  %582 = vmatmul.mubr.f32.gmra.mrb[0].mxu0 %v581
  %v583 = vpop.f32.mrb[0].mxu0
  %v584 = vadd.f32 %v439, %v583
  %v585 = vpop.f32.mrb[0].mxu0
  %v586 = vand.u32 %v16, 4294901760
  %v587 = vsub.f32 %v16, %v586
  %588 = vmatprep.mubr.f32.mxu0 %v587
  %v589 = vand.u32 %v15, 4294901760
  %v590 = vsub.f32 %v15, %v589
  %591 = vmatmul.mubr.f32.gmra.mrb[0].mxu0 %v590
  %v592 = vpop.f32.mrb[0].mxu0
  %v593 = vadd.f32 %v446, %v592
  %v594 = vpop.f32.mrb[0].mxu0
  %595 = vdwg.mxu0
  %596 = vmatprep.subr.mxu0 0.0
  %v597 = vand.u32 %v19, 4294901760
  %598 = vmatpush1.msra.mxu0 %v597
  %599 = vmatprep.subr.mxu0 0.0
  %v600 = vand.u32 %v20, 4294901760
  %601 = vmatpush1.msra.mxu0 %v600
  %602 = vmatprep.subr.mxu0 0.0
  %v603 = vand.u32 %v21, 4294901760
  %604 = vmatpush1.msra.mxu0 %v603
  %605 = vmatprep.subr.mxu0 0.0
  %v606 = vand.u32 %v22, 4294901760
  %607 = vmatpush1.msra.mxu0 %v606
  %608 = vmatprep.subr.mxu0 0.0
  %v609 = vand.u32 %v23, 4294901760
  %610 = vmatpush1.msra.mxu0 %v609
  %611 = vmatprep.subr.mxu0 0.0
  %v612 = vand.u32 %v24, 4294901760
  %613 = vmatpush1.msra.mxu0 %v612
  %614 = vmatprep.subr.mxu0 0.0
  %v615 = vand.u32 %v25, 4294901760
  %616 = vmatpush1.msra.mxu0 %v615
  %617 = vmatprep.subr.mxu0 0.0
  %v618 = vand.u32 %v26, 4294901760
  %619 = vmatpush1.msra.mxu0 %v618
  %620 = vmatprep.subr.mxu0 0.0
  %v621 = vand.u32 %v27, 4294901760
  %622 = vmatpush1.msra.mxu0 %v621
  %623 = vmatprep.subr.mxu0 0.0
  %v624 = vand.u32 %v28, 4294901760
  %625 = vmatpush1.msra.mxu0 %v624
  %626 = vmatprep.subr.mxu0 0.0
  %v627 = vand.u32 %v29, 4294901760
  %628 = vmatpush1.msra.mxu0 %v627
  %629 = vmatprep.subr.mxu0 0.0
  %v630 = vand.u32 %v30, 4294901760
  %631 = vmatpush1.msra.mxu0 %v630
  %632 = vmatprep.subr.mxu0 0.0
  %v633 = vand.u32 %v31, 4294901760
  %634 = vmatpush1.msra.mxu0 %v633
  %635 = vmatprep.subr.mxu0 0.0
  %v636 = vand.u32 %v32, 4294901760
  %637 = vmatpush1.msra.mxu0 %v636
  %638 = vmatprep.subr.mxu0 0.0
  %v639 = vand.u32 %v33, 4294901760
  %640 = vmatpush1.msra.mxu0 %v639
  %641 = vmatprep.subr.mxu0 0.0
  %v642 = vand.u32 %v34, 4294901760
  %643 = vmatpush1.msra.mxu0 %v642
  %644 = vmatprep.subr.mxu0 0.0
  %v645 = vand.u32 %v35, 4294901760
  %646 = vmatpush1.msra.mxu0 %v645
  %647 = vmatprep.subr.mxu0 0.0
  %v648 = vand.u32 %v36, 4294901760
  %649 = vmatpush1.msra.mxu0 %v648
  %650 = vmatprep.subr.mxu0 0.0
  %v651 = vand.u32 %v37, 4294901760
  %652 = vmatpush1.msra.mxu0 %v651
  %653 = vmatprep.subr.mxu0 0.0
  %v654 = vand.u32 %v38, 4294901760
  %655 = vmatpush1.msra.mxu0 %v654
  %656 = vmatprep.subr.mxu0 0.0
  %v657 = vand.u32 %v39, 4294901760
  %658 = vmatpush1.msra.mxu0 %v657
  %659 = vmatprep.subr.mxu0 0.0
  %v660 = vand.u32 %v40, 4294901760
  %661 = vmatpush1.msra.mxu0 %v660
  %662 = vmatprep.subr.mxu0 0.0
  %v663 = vand.u32 %v41, 4294901760
  %664 = vmatpush1.msra.mxu0 %v663
  %665 = vmatprep.subr.mxu0 0.0
  %v666 = vand.u32 %v42, 4294901760
  %667 = vmatpush1.msra.mxu0 %v666
  %668 = vmatprep.subr.mxu0 0.0
  %v669 = vand.u32 %v43, 4294901760
  %670 = vmatpush1.msra.mxu0 %v669
  %671 = vmatprep.subr.mxu0 0.0
  %v672 = vand.u32 %v44, 4294901760
  %673 = vmatpush1.msra.mxu0 %v672
  %674 = vmatprep.subr.mxu0 0.0
  %v675 = vand.u32 %v45, 4294901760
  %676 = vmatpush1.msra.mxu0 %v675
  %677 = vmatprep.subr.mxu0 0.0
  %v678 = vand.u32 %v46, 4294901760
  %679 = vmatpush1.msra.mxu0 %v678
  %680 = vmatprep.subr.mxu0 0.0
  %v681 = vand.u32 %v47, 4294901760
  %682 = vmatpush1.msra.mxu0 %v681
  %683 = vmatprep.subr.mxu0 0.0
  %v684 = vand.u32 %v48, 4294901760
  %685 = vmatpush1.msra.mxu0 %v684
  %686 = vmatprep.subr.mxu0 0.0
  %v687 = vand.u32 %v49, 4294901760
  %688 = vmatpush1.msra.mxu0 %v687
  %689 = vmatprep.subr.mxu0 0.0
  %v690 = vand.u32 %v50, 4294901760
  %691 = vmatpush1.msra.mxu0 %v690
  %v692 = vand.u32 %v12, 4294901760
  %v693 = vsub.f32 %v12, %v692
  %v694 = vand.u32 %v693, 4294901760
  %695 = vmatprep.mubr.f32.mxu0 %v694
  %v696 = vand.u32 %v11, 4294901760
  %v697 = vsub.f32 %v11, %v696
  %v698 = vand.u32 %v697, 4294901760
  %699 = vmatmul.mubr.f32.gmra.mrb[0].mxu0 %v698
  %v700 = vpop.f32.mrb[0].mxu0
  %v701 = vadd.f32 %v584, %v700
  %v702 = vpop.f32.mrb[0].mxu0
  %v703 = vand.u32 %v16, 4294901760
  %v704 = vsub.f32 %v16, %v703
  %v705 = vand.u32 %v704, 4294901760
  %706 = vmatprep.mubr.f32.mxu0 %v705
  %v707 = vand.u32 %v15, 4294901760
  %v708 = vsub.f32 %v15, %v707
  %v709 = vand.u32 %v708, 4294901760
  %710 = vmatmul.mubr.f32.gmra.mrb[0].mxu0 %v709
  %v711 = vpop.f32.mrb[0].mxu0
  %v712 = vadd.f32 %v593, %v711
  %v713 = vpop.f32.mrb[0].mxu0
  %714 = vdwg.mxu0
  %715 = vmatprep.subr.mxu0 0.0
  %v716 = vand.u32 %v19, 4294901760
  %v717 = vsub.f32 %v19, %v716
  %v718 = vand.u32 %v717, 4294901760
  %719 = vmatpush1.msra.mxu0 %v718
  %720 = vmatprep.subr.mxu0 0.0
  %v721 = vand.u32 %v20, 4294901760
  %v722 = vsub.f32 %v20, %v721
  %v723 = vand.u32 %v722, 4294901760
  %724 = vmatpush1.msra.mxu0 %v723
  %725 = vmatprep.subr.mxu0 0.0
  %v726 = vand.u32 %v21, 4294901760
  %v727 = vsub.f32 %v21, %v726
  %v728 = vand.u32 %v727, 4294901760
  %729 = vmatpush1.msra.mxu0 %v728
  %730 = vmatprep.subr.mxu0 0.0
  %v731 = vand.u32 %v22, 4294901760
  %v732 = vsub.f32 %v22, %v731
  %v733 = vand.u32 %v732, 4294901760
  %734 = vmatpush1.msra.mxu0 %v733
  %735 = vmatprep.subr.mxu0 0.0
  %v736 = vand.u32 %v23, 4294901760
  %v737 = vsub.f32 %v23, %v736
  %v738 = vand.u32 %v737, 4294901760
  %739 = vmatpush1.msra.mxu0 %v738
  %740 = vmatprep.subr.mxu0 0.0
  %v741 = vand.u32 %v24, 4294901760
  %v742 = vsub.f32 %v24, %v741
  %v743 = vand.u32 %v742, 4294901760
  %744 = vmatpush1.msra.mxu0 %v743
  %745 = vmatprep.subr.mxu0 0.0
  %v746 = vand.u32 %v25, 4294901760
  %v747 = vsub.f32 %v25, %v746
  %v748 = vand.u32 %v747, 4294901760
  %749 = vmatpush1.msra.mxu0 %v748
  %750 = vmatprep.subr.mxu0 0.0
  %v751 = vand.u32 %v26, 4294901760
  %v752 = vsub.f32 %v26, %v751
  %v753 = vand.u32 %v752, 4294901760
  %754 = vmatpush1.msra.mxu0 %v753
  %755 = vmatprep.subr.mxu0 0.0
  %v756 = vand.u32 %v27, 4294901760
  %v757 = vsub.f32 %v27, %v756
  %v758 = vand.u32 %v757, 4294901760
  %759 = vmatpush1.msra.mxu0 %v758
  %760 = vmatprep.subr.mxu0 0.0
  %v761 = vand.u32 %v28, 4294901760
  %v762 = vsub.f32 %v28, %v761
  %v763 = vand.u32 %v762, 4294901760
  %764 = vmatpush1.msra.mxu0 %v763
  %765 = vmatprep.subr.mxu0 0.0
  %v766 = vand.u32 %v29, 4294901760
  %v767 = vsub.f32 %v29, %v766
  %v768 = vand.u32 %v767, 4294901760
  %769 = vmatpush1.msra.mxu0 %v768
  %770 = vmatprep.subr.mxu0 0.0
  %v771 = vand.u32 %v30, 4294901760
  %v772 = vsub.f32 %v30, %v771
  %v773 = vand.u32 %v772, 4294901760
  %774 = vmatpush1.msra.mxu0 %v773
  %775 = vmatprep.subr.mxu0 0.0
  %v776 = vand.u32 %v31, 4294901760
  %v777 = vsub.f32 %v31, %v776
  %v778 = vand.u32 %v777, 4294901760
  %779 = vmatpush1.msra.mxu0 %v778
  %780 = vmatprep.subr.mxu0 0.0
  %v781 = vand.u32 %v32, 4294901760
  %v782 = vsub.f32 %v32, %v781
  %v783 = vand.u32 %v782, 4294901760
  %784 = vmatpush1.msra.mxu0 %v783
  %785 = vmatprep.subr.mxu0 0.0
  %v786 = vand.u32 %v33, 4294901760
  %v787 = vsub.f32 %v33, %v786
  %v788 = vand.u32 %v787, 4294901760
  %789 = vmatpush1.msra.mxu0 %v788
  %790 = vmatprep.subr.mxu0 0.0
  %v791 = vand.u32 %v34, 4294901760
  %v792 = vsub.f32 %v34, %v791
  %v793 = vand.u32 %v792, 4294901760
  %794 = vmatpush1.msra.mxu0 %v793
  %795 = vmatprep.subr.mxu0 0.0
  %v796 = vand.u32 %v35, 4294901760
  %v797 = vsub.f32 %v35, %v796
  %v798 = vand.u32 %v797, 4294901760
  %799 = vmatpush1.msra.mxu0 %v798
  %800 = vmatprep.subr.mxu0 0.0
  %v801 = vand.u32 %v36, 4294901760
  %v802 = vsub.f32 %v36, %v801
  %v803 = vand.u32 %v802, 4294901760
  %804 = vmatpush1.msra.mxu0 %v803
  %805 = vmatprep.subr.mxu0 0.0
  %v806 = vand.u32 %v37, 4294901760
  %v807 = vsub.f32 %v37, %v806
  %v808 = vand.u32 %v807, 4294901760
  %809 = vmatpush1.msra.mxu0 %v808
  %810 = vmatprep.subr.mxu0 0.0
  %v811 = vand.u32 %v38, 4294901760
  %v812 = vsub.f32 %v38, %v811
  %v813 = vand.u32 %v812, 4294901760
  %814 = vmatpush1.msra.mxu0 %v813
  %815 = vmatprep.subr.mxu0 0.0
  %v816 = vand.u32 %v39, 4294901760
  %v817 = vsub.f32 %v39, %v816
  %v818 = vand.u32 %v817, 4294901760
  %819 = vmatpush1.msra.mxu0 %v818
  %820 = vmatprep.subr.mxu0 0.0
  %v821 = vand.u32 %v40, 4294901760
  %v822 = vsub.f32 %v40, %v821
  %v823 = vand.u32 %v822, 4294901760
  %824 = vmatpush1.msra.mxu0 %v823
  %825 = vmatprep.subr.mxu0 0.0
  %v826 = vand.u32 %v41, 4294901760
  %v827 = vsub.f32 %v41, %v826
  %v828 = vand.u32 %v827, 4294901760
  %829 = vmatpush1.msra.mxu0 %v828
  %830 = vmatprep.subr.mxu0 0.0
  %v831 = vand.u32 %v42, 4294901760
  %v832 = vsub.f32 %v42, %v831
  %v833 = vand.u32 %v832, 4294901760
  %834 = vmatpush1.msra.mxu0 %v833
  %835 = vmatprep.subr.mxu0 0.0
  %v836 = vand.u32 %v43, 4294901760
  %v837 = vsub.f32 %v43, %v836
  %v838 = vand.u32 %v837, 4294901760
  %839 = vmatpush1.msra.mxu0 %v838
  %840 = vmatprep.subr.mxu0 0.0
  %v841 = vand.u32 %v44, 4294901760
  %v842 = vsub.f32 %v44, %v841
  %v843 = vand.u32 %v842, 4294901760
  %844 = vmatpush1.msra.mxu0 %v843
  %845 = vmatprep.subr.mxu0 0.0
  %v846 = vand.u32 %v45, 4294901760
  %v847 = vsub.f32 %v45, %v846
  %v848 = vand.u32 %v847, 4294901760
  %849 = vmatpush1.msra.mxu0 %v848
  %850 = vmatprep.subr.mxu0 0.0
  %v851 = vand.u32 %v46, 4294901760
  %v852 = vsub.f32 %v46, %v851
  %v853 = vand.u32 %v852, 4294901760
  %854 = vmatpush1.msra.mxu0 %v853
  %855 = vmatprep.subr.mxu0 0.0
  %v856 = vand.u32 %v47, 4294901760
  %v857 = vsub.f32 %v47, %v856
  %v858 = vand.u32 %v857, 4294901760
  %859 = vmatpush1.msra.mxu0 %v858
  %860 = vmatprep.subr.mxu0 0.0
  %v861 = vand.u32 %v48, 4294901760
  %v862 = vsub.f32 %v48, %v861
  %v863 = vand.u32 %v862, 4294901760
  %864 = vmatpush1.msra.mxu0 %v863
  %865 = vmatprep.subr.mxu0 0.0
  %v866 = vand.u32 %v49, 4294901760
  %v867 = vsub.f32 %v49, %v866
  %v868 = vand.u32 %v867, 4294901760
  %869 = vmatpush1.msra.mxu0 %v868
  %870 = vmatprep.subr.mxu0 0.0
  %v871 = vand.u32 %v50, 4294901760
  %v872 = vsub.f32 %v50, %v871
  %v873 = vand.u32 %v872, 4294901760
  %874 = vmatpush1.msra.mxu0 %v873
  %v875 = vand.u32 %v12, 4294901760
  %876 = vmatprep.mubr.f32.mxu0 %v875
  %v877 = vand.u32 %v11, 4294901760
  %878 = vmatmul.mubr.f32.gmra.mrb[0].mxu0 %v877
  %v879 = vpop.f32.mrb[0].mxu0
  %v880 = vadd.f32 %v701, %v879
  %v881 = vpop.f32.mrb[0].mxu0
  %v882 = vand.u32 %v16, 4294901760
  %883 = vmatprep.mubr.f32.mxu0 %v882
  %v884 = vand.u32 %v15, 4294901760
  %885 = vmatmul.mubr.f32.gmra.mrb[0].mxu0 %v884
  %v886 = vpop.f32.mrb[0].mxu0
  %v887 = vadd.f32 %v712, %v886
  %v888 = vpop.f32.mrb[0].mxu0
  %889 = vdwg.mxu0
  %890 = vmatprep.subr.mxu0 0.0
  %v891 = vand.u32 %v19, 4294901760
  %892 = vmatpush1.msra.mxu0 %v891
  %893 = vmatprep.subr.mxu0 0.0
  %v894 = vand.u32 %v20, 4294901760
  %895 = vmatpush1.msra.mxu0 %v894
  %896 = vmatprep.subr.mxu0 0.0
  %v897 = vand.u32 %v21, 4294901760
  %898 = vmatpush1.msra.mxu0 %v897
  %899 = vmatprep.subr.mxu0 0.0
  %v900 = vand.u32 %v22, 4294901760
  %901 = vmatpush1.msra.mxu0 %v900
  %902 = vmatprep.subr.mxu0 0.0
  %v903 = vand.u32 %v23, 4294901760
  %904 = vmatpush1.msra.mxu0 %v903
  %905 = vmatprep.subr.mxu0 0.0
  %v906 = vand.u32 %v24, 4294901760
  %907 = vmatpush1.msra.mxu0 %v906
  %908 = vmatprep.subr.mxu0 0.0
  %v909 = vand.u32 %v25, 4294901760
  %910 = vmatpush1.msra.mxu0 %v909
  %911 = vmatprep.subr.mxu0 0.0
  %v912 = vand.u32 %v26, 4294901760
  %913 = vmatpush1.msra.mxu0 %v912
  %914 = vmatprep.subr.mxu0 0.0
  %v915 = vand.u32 %v27, 4294901760
  %916 = vmatpush1.msra.mxu0 %v915
  %917 = vmatprep.subr.mxu0 0.0
  %v918 = vand.u32 %v28, 4294901760
  %919 = vmatpush1.msra.mxu0 %v918
  %920 = vmatprep.subr.mxu0 0.0
  %v921 = vand.u32 %v29, 4294901760
  %922 = vmatpush1.msra.mxu0 %v921
  %923 = vmatprep.subr.mxu0 0.0
  %v924 = vand.u32 %v30, 4294901760
  %925 = vmatpush1.msra.mxu0 %v924
  %926 = vmatprep.subr.mxu0 0.0
  %v927 = vand.u32 %v31, 4294901760
  %928 = vmatpush1.msra.mxu0 %v927
  %929 = vmatprep.subr.mxu0 0.0
  %v930 = vand.u32 %v32, 4294901760
  %931 = vmatpush1.msra.mxu0 %v930
  %932 = vmatprep.subr.mxu0 0.0
  %v933 = vand.u32 %v33, 4294901760
  %934 = vmatpush1.msra.mxu0 %v933
  %935 = vmatprep.subr.mxu0 0.0
  %v936 = vand.u32 %v34, 4294901760
  %937 = vmatpush1.msra.mxu0 %v936
  %938 = vmatprep.subr.mxu0 0.0
  %v939 = vand.u32 %v35, 4294901760
  %940 = vmatpush1.msra.mxu0 %v939
  %941 = vmatprep.subr.mxu0 0.0
  %v942 = vand.u32 %v36, 4294901760
  %943 = vmatpush1.msra.mxu0 %v942
  %944 = vmatprep.subr.mxu0 0.0
  %v945 = vand.u32 %v37, 4294901760
  %946 = vmatpush1.msra.mxu0 %v945
  %947 = vmatprep.subr.mxu0 0.0
  %v948 = vand.u32 %v38, 4294901760
  %949 = vmatpush1.msra.mxu0 %v948
  %950 = vmatprep.subr.mxu0 0.0
  %v951 = vand.u32 %v39, 4294901760
  %952 = vmatpush1.msra.mxu0 %v951
  %953 = vmatprep.subr.mxu0 0.0
  %v954 = vand.u32 %v40, 4294901760
  %955 = vmatpush1.msra.mxu0 %v954
  %956 = vmatprep.subr.mxu0 0.0
  %v957 = vand.u32 %v41, 4294901760
  %958 = vmatpush1.msra.mxu0 %v957
  %959 = vmatprep.subr.mxu0 0.0
  %v960 = vand.u32 %v42, 4294901760
  %961 = vmatpush1.msra.mxu0 %v960
  %962 = vmatprep.subr.mxu0 0.0
  %v963 = vand.u32 %v43, 4294901760
  %964 = vmatpush1.msra.mxu0 %v963
  %965 = vmatprep.subr.mxu0 0.0
  %v966 = vand.u32 %v44, 4294901760
  %967 = vmatpush1.msra.mxu0 %v966
  %968 = vmatprep.subr.mxu0 0.0
  %v969 = vand.u32 %v45, 4294901760
  %970 = vmatpush1.msra.mxu0 %v969
  %971 = vmatprep.subr.mxu0 0.0
  %v972 = vand.u32 %v46, 4294901760
  %973 = vmatpush1.msra.mxu0 %v972
  %974 = vmatprep.subr.mxu0 0.0
  %v975 = vand.u32 %v47, 4294901760
  %976 = vmatpush1.msra.mxu0 %v975
  %977 = vmatprep.subr.mxu0 0.0
  %v978 = vand.u32 %v48, 4294901760
  %979 = vmatpush1.msra.mxu0 %v978
  %980 = vmatprep.subr.mxu0 0.0
  %v981 = vand.u32 %v49, 4294901760
  %982 = vmatpush1.msra.mxu0 %v981
  %983 = vmatprep.subr.mxu0 0.0
  %v984 = vand.u32 %v50, 4294901760
  %985 = vmatpush1.msra.mxu0 %v984
  %v986 = vand.u32 %v12, 4294901760
  %987 = vmatprep.mubr.f32.mxu0 %v986
  %v988 = vand.u32 %v11, 4294901760
  %989 = vmatmul.mubr.f32.gmra.mrb[0].mxu0 %v988
  %v990 = vpop.f32.mrb[0].mxu0
  %v991 = vadd.f32 %v880, %v990
  %v992 = vpop.f32.mrb[0].mxu0
  %v993 = vand.u32 %v16, 4294901760
  %994 = vmatprep.mubr.f32.mxu0 %v993
  %v995 = vand.u32 %v15, 4294901760
  %996 = vmatmul.mubr.f32.gmra.mrb[0].mxu0 %v995
  %v997 = vpop.f32.mrb[0].mxu0
  %v998 = vadd.f32 %v887, %v997
  %v999 = vpop.f32.mrb[0].mxu0
  %1000 = vdwg.mxu0
  %1001 = vmatprep.subr.mxu0 0.0
  %v1002 = vand.u32 %v51, 4294901760
  %1003 = vmatpush1.msra.mxu0 %v1002
  %1004 = vmatprep.subr.mxu0 0.0
  %v1005 = vand.u32 %v52, 4294901760
  %1006 = vmatpush1.msra.mxu0 %v1005
  %1007 = vmatprep.subr.mxu0 0.0
  %v1008 = vand.u32 %v53, 4294901760
  %1009 = vmatpush1.msra.mxu0 %v1008
  %1010 = vmatprep.subr.mxu0 0.0
  %v1011 = vand.u32 %v54, 4294901760
  %1012 = vmatpush1.msra.mxu0 %v1011
  %1013 = vmatprep.subr.mxu0 0.0
  %v1014 = vand.u32 %v55, 4294901760
  %1015 = vmatpush1.msra.mxu0 %v1014
  %1016 = vmatprep.subr.mxu0 0.0
  %v1017 = vand.u32 %v56, 4294901760
  %1018 = vmatpush1.msra.mxu0 %v1017
  %1019 = vmatprep.subr.mxu0 0.0
  %v1020 = vand.u32 %v57, 4294901760
  %1021 = vmatpush1.msra.mxu0 %v1020
  %1022 = vmatprep.subr.mxu0 0.0
  %v1023 = vand.u32 %v58, 4294901760
  %1024 = vmatpush1.msra.mxu0 %v1023
  %1025 = vmatprep.subr.mxu0 0.0
  %v1026 = vand.u32 %v59, 4294901760
  %1027 = vmatpush1.msra.mxu0 %v1026
  %1028 = vmatprep.subr.mxu0 0.0
  %v1029 = vand.u32 %v60, 4294901760
  %1030 = vmatpush1.msra.mxu0 %v1029
  %1031 = vmatprep.subr.mxu0 0.0
  %v1032 = vand.u32 %v61, 4294901760
  %1033 = vmatpush1.msra.mxu0 %v1032
  %1034 = vmatprep.subr.mxu0 0.0
  %v1035 = vand.u32 %v62, 4294901760
  %1036 = vmatpush1.msra.mxu0 %v1035
  %1037 = vmatprep.subr.mxu0 0.0
  %v1038 = vand.u32 %v63, 4294901760
  %1039 = vmatpush1.msra.mxu0 %v1038
  %1040 = vmatprep.subr.mxu0 0.0
  %v1041 = vand.u32 %v64, 4294901760
  %1042 = vmatpush1.msra.mxu0 %v1041
  %1043 = vmatprep.subr.mxu0 0.0
  %v1044 = vand.u32 %v65, 4294901760
  %1045 = vmatpush1.msra.mxu0 %v1044
  %1046 = vmatprep.subr.mxu0 0.0
  %v1047 = vand.u32 %v66, 4294901760
  %1048 = vmatpush1.msra.mxu0 %v1047
  %1049 = vmatprep.subr.mxu0 0.0
  %v1050 = vand.u32 %v67, 4294901760
  %1051 = vmatpush1.msra.mxu0 %v1050
  %1052 = vmatprep.subr.mxu0 0.0
  %v1053 = vand.u32 %v68, 4294901760
  %1054 = vmatpush1.msra.mxu0 %v1053
  %1055 = vmatprep.subr.mxu0 0.0
  %v1056 = vand.u32 %v69, 4294901760
  %1057 = vmatpush1.msra.mxu0 %v1056
  %1058 = vmatprep.subr.mxu0 0.0
  %v1059 = vand.u32 %v70, 4294901760
  %1060 = vmatpush1.msra.mxu0 %v1059
  %1061 = vmatprep.subr.mxu0 0.0
  %v1062 = vand.u32 %v71, 4294901760
  %1063 = vmatpush1.msra.mxu0 %v1062
  %1064 = vmatprep.subr.mxu0 0.0
  %v1065 = vand.u32 %v72, 4294901760
  %1066 = vmatpush1.msra.mxu0 %v1065
  %1067 = vmatprep.subr.mxu0 0.0
  %v1068 = vand.u32 %v73, 4294901760
  %1069 = vmatpush1.msra.mxu0 %v1068
  %1070 = vmatprep.subr.mxu0 0.0
  %v1071 = vand.u32 %v74, 4294901760
  %1072 = vmatpush1.msra.mxu0 %v1071
  %1073 = vmatprep.subr.mxu0 0.0
  %v1074 = vand.u32 %v75, 4294901760
  %1075 = vmatpush1.msra.mxu0 %v1074
  %1076 = vmatprep.subr.mxu0 0.0
  %v1077 = vand.u32 %v76, 4294901760
  %1078 = vmatpush1.msra.mxu0 %v1077
  %1079 = vmatprep.subr.mxu0 0.0
  %v1080 = vand.u32 %v77, 4294901760
  %1081 = vmatpush1.msra.mxu0 %v1080
  %1082 = vmatprep.subr.mxu0 0.0
  %v1083 = vand.u32 %v78, 4294901760
  %1084 = vmatpush1.msra.mxu0 %v1083
  %1085 = vmatprep.subr.mxu0 0.0
  %v1086 = vand.u32 %v79, 4294901760
  %1087 = vmatpush1.msra.mxu0 %v1086
  %1088 = vmatprep.subr.mxu0 0.0
  %v1089 = vand.u32 %v80, 4294901760
  %1090 = vmatpush1.msra.mxu0 %v1089
  %1091 = vmatprep.subr.mxu0 0.0
  %v1092 = vand.u32 %v81, 4294901760
  %1093 = vmatpush1.msra.mxu0 %v1092
  %1094 = vmatprep.subr.mxu0 0.0
  %v1095 = vand.u32 %v82, 4294901760
  %1096 = vmatpush1.msra.mxu0 %v1095
  %v1097 = vand.u32 %v14, 4294901760
  %v1098 = vsub.f32 %v14, %v1097
  %v1099 = vand.u32 %v1098, 4294901760
  %v1100 = vsub.f32 %v1098, %v1099
  %v1101 = vand.u32 %v1100, 4294901760
  %1102 = vmatprep.mubr.f32.mxu0 %v1101
  %v1103 = vand.u32 %v13, 4294901760
  %v1104 = vsub.f32 %v13, %v1103
  %v1105 = vand.u32 %v1104, 4294901760
  %v1106 = vsub.f32 %v1104, %v1105
  %v1107 = vand.u32 %v1106, 4294901760
  %1108 = vmatmul.mubr.f32.gmra.mrb[0].mxu0 %v1107
  %v1109 = vpop.f32.mrb[0].mxu0
  %v1110 = vadd.f32 %v991, %v1109
  %v1111 = vpop.f32.mrb[0].mxu0
  %v1112 = vand.u32 %v18, 4294901760
  %v1113 = vsub.f32 %v18, %v1112
  %v1114 = vand.u32 %v1113, 4294901760
  %v1115 = vsub.f32 %v1113, %v1114
  %v1116 = vand.u32 %v1115, 4294901760
  %1117 = vmatprep.mubr.f32.mxu0 %v1116
  %v1118 = vand.u32 %v17, 4294901760
  %v1119 = vsub.f32 %v17, %v1118
  %v1120 = vand.u32 %v1119, 4294901760
  %v1121 = vsub.f32 %v1119, %v1120
  %v1122 = vand.u32 %v1121, 4294901760
  %1123 = vmatmul.mubr.f32.gmra.mrb[0].mxu0 %v1122
  %v1124 = vpop.f32.mrb[0].mxu0
  %v1125 = vadd.f32 %v998, %v1124
  %v1126 = vpop.f32.mrb[0].mxu0
  %1127 = vdwg.mxu0
  %1128 = vmatprep.subr.mxu0 0.0
  %v1129 = vand.u32 %v51, 4294901760
  %v1130 = vsub.f32 %v51, %v1129
  %v1131 = vand.u32 %v1130, 4294901760
  %v1132 = vsub.f32 %v1130, %v1131
  %v1133 = vand.u32 %v1132, 4294901760
  %1134 = vmatpush1.msra.mxu0 %v1133
  %1135 = vmatprep.subr.mxu0 0.0
  %v1136 = vand.u32 %v52, 4294901760
  %v1137 = vsub.f32 %v52, %v1136
  %v1138 = vand.u32 %v1137, 4294901760
  %v1139 = vsub.f32 %v1137, %v1138
  %v1140 = vand.u32 %v1139, 4294901760
  %1141 = vmatpush1.msra.mxu0 %v1140
  %1142 = vmatprep.subr.mxu0 0.0
  %v1143 = vand.u32 %v53, 4294901760
  %v1144 = vsub.f32 %v53, %v1143
  %v1145 = vand.u32 %v1144, 4294901760
  %v1146 = vsub.f32 %v1144, %v1145
  %v1147 = vand.u32 %v1146, 4294901760
  %1148 = vmatpush1.msra.mxu0 %v1147
  %1149 = vmatprep.subr.mxu0 0.0
  %v1150 = vand.u32 %v54, 4294901760
  %v1151 = vsub.f32 %v54, %v1150
  %v1152 = vand.u32 %v1151, 4294901760
  %v1153 = vsub.f32 %v1151, %v1152
  %v1154 = vand.u32 %v1153, 4294901760
  %1155 = vmatpush1.msra.mxu0 %v1154
  %1156 = vmatprep.subr.mxu0 0.0
  %v1157 = vand.u32 %v55, 4294901760
  %v1158 = vsub.f32 %v55, %v1157
  %v1159 = vand.u32 %v1158, 4294901760
  %v1160 = vsub.f32 %v1158, %v1159
  %v1161 = vand.u32 %v1160, 4294901760
  %1162 = vmatpush1.msra.mxu0 %v1161
  %1163 = vmatprep.subr.mxu0 0.0
  %v1164 = vand.u32 %v56, 4294901760
  %v1165 = vsub.f32 %v56, %v1164
  %v1166 = vand.u32 %v1165, 4294901760
  %v1167 = vsub.f32 %v1165, %v1166
  %v1168 = vand.u32 %v1167, 4294901760
  %1169 = vmatpush1.msra.mxu0 %v1168
  %1170 = vmatprep.subr.mxu0 0.0
  %v1171 = vand.u32 %v57, 4294901760
  %v1172 = vsub.f32 %v57, %v1171
  %v1173 = vand.u32 %v1172, 4294901760
  %v1174 = vsub.f32 %v1172, %v1173
  %v1175 = vand.u32 %v1174, 4294901760
  %1176 = vmatpush1.msra.mxu0 %v1175
  %1177 = vmatprep.subr.mxu0 0.0
  %v1178 = vand.u32 %v58, 4294901760
  %v1179 = vsub.f32 %v58, %v1178
  %v1180 = vand.u32 %v1179, 4294901760
  %v1181 = vsub.f32 %v1179, %v1180
  %v1182 = vand.u32 %v1181, 4294901760
  %1183 = vmatpush1.msra.mxu0 %v1182
  %1184 = vmatprep.subr.mxu0 0.0
  %v1185 = vand.u32 %v59, 4294901760
  %v1186 = vsub.f32 %v59, %v1185
  %v1187 = vand.u32 %v1186, 4294901760
  %v1188 = vsub.f32 %v1186, %v1187
  %v1189 = vand.u32 %v1188, 4294901760
  %1190 = vmatpush1.msra.mxu0 %v1189
  %1191 = vmatprep.subr.mxu0 0.0
  %v1192 = vand.u32 %v60, 4294901760
  %v1193 = vsub.f32 %v60, %v1192
  %v1194 = vand.u32 %v1193, 4294901760
  %v1195 = vsub.f32 %v1193, %v1194
  %v1196 = vand.u32 %v1195, 4294901760
  %1197 = vmatpush1.msra.mxu0 %v1196
  %1198 = vmatprep.subr.mxu0 0.0
  %v1199 = vand.u32 %v61, 4294901760
  %v1200 = vsub.f32 %v61, %v1199
  %v1201 = vand.u32 %v1200, 4294901760
  %v1202 = vsub.f32 %v1200, %v1201
  %v1203 = vand.u32 %v1202, 4294901760
  %1204 = vmatpush1.msra.mxu0 %v1203
  %1205 = vmatprep.subr.mxu0 0.0
  %v1206 = vand.u32 %v62, 4294901760
  %v1207 = vsub.f32 %v62, %v1206
  %v1208 = vand.u32 %v1207, 4294901760
  %v1209 = vsub.f32 %v1207, %v1208
  %v1210 = vand.u32 %v1209, 4294901760
  %1211 = vmatpush1.msra.mxu0 %v1210
  %1212 = vmatprep.subr.mxu0 0.0
  %v1213 = vand.u32 %v63, 4294901760
  %v1214 = vsub.f32 %v63, %v1213
  %v1215 = vand.u32 %v1214, 4294901760
  %v1216 = vsub.f32 %v1214, %v1215
  %v1217 = vand.u32 %v1216, 4294901760
  %1218 = vmatpush1.msra.mxu0 %v1217
  %1219 = vmatprep.subr.mxu0 0.0
  %v1220 = vand.u32 %v64, 4294901760
  %v1221 = vsub.f32 %v64, %v1220
  %v1222 = vand.u32 %v1221, 4294901760
  %v1223 = vsub.f32 %v1221, %v1222
  %v1224 = vand.u32 %v1223, 4294901760
  %1225 = vmatpush1.msra.mxu0 %v1224
  %1226 = vmatprep.subr.mxu0 0.0
  %v1227 = vand.u32 %v65, 4294901760
  %v1228 = vsub.f32 %v65, %v1227
  %v1229 = vand.u32 %v1228, 4294901760
  %v1230 = vsub.f32 %v1228, %v1229
  %v1231 = vand.u32 %v1230, 4294901760
  %1232 = vmatpush1.msra.mxu0 %v1231
  %1233 = vmatprep.subr.mxu0 0.0
  %v1234 = vand.u32 %v66, 4294901760
  %v1235 = vsub.f32 %v66, %v1234
  %v1236 = vand.u32 %v1235, 4294901760
  %v1237 = vsub.f32 %v1235, %v1236
  %v1238 = vand.u32 %v1237, 4294901760
  %1239 = vmatpush1.msra.mxu0 %v1238
  %1240 = vmatprep.subr.mxu0 0.0
  %v1241 = vand.u32 %v67, 4294901760
  %v1242 = vsub.f32 %v67, %v1241
  %v1243 = vand.u32 %v1242, 4294901760
  %v1244 = vsub.f32 %v1242, %v1243
  %v1245 = vand.u32 %v1244, 4294901760
  %1246 = vmatpush1.msra.mxu0 %v1245
  %1247 = vmatprep.subr.mxu0 0.0
  %v1248 = vand.u32 %v68, 4294901760
  %v1249 = vsub.f32 %v68, %v1248
  %v1250 = vand.u32 %v1249, 4294901760
  %v1251 = vsub.f32 %v1249, %v1250
  %v1252 = vand.u32 %v1251, 4294901760
  %1253 = vmatpush1.msra.mxu0 %v1252
  %1254 = vmatprep.subr.mxu0 0.0
  %v1255 = vand.u32 %v69, 4294901760
  %v1256 = vsub.f32 %v69, %v1255
  %v1257 = vand.u32 %v1256, 4294901760
  %v1258 = vsub.f32 %v1256, %v1257
  %v1259 = vand.u32 %v1258, 4294901760
  %1260 = vmatpush1.msra.mxu0 %v1259
  %1261 = vmatprep.subr.mxu0 0.0
  %v1262 = vand.u32 %v70, 4294901760
  %v1263 = vsub.f32 %v70, %v1262
  %v1264 = vand.u32 %v1263, 4294901760
  %v1265 = vsub.f32 %v1263, %v1264
  %v1266 = vand.u32 %v1265, 4294901760
  %1267 = vmatpush1.msra.mxu0 %v1266
  %1268 = vmatprep.subr.mxu0 0.0
  %v1269 = vand.u32 %v71, 4294901760
  %v1270 = vsub.f32 %v71, %v1269
  %v1271 = vand.u32 %v1270, 4294901760
  %v1272 = vsub.f32 %v1270, %v1271
  %v1273 = vand.u32 %v1272, 4294901760
  %1274 = vmatpush1.msra.mxu0 %v1273
  %1275 = vmatprep.subr.mxu0 0.0
  %v1276 = vand.u32 %v72, 4294901760
  %v1277 = vsub.f32 %v72, %v1276
  %v1278 = vand.u32 %v1277, 4294901760
  %v1279 = vsub.f32 %v1277, %v1278
  %v1280 = vand.u32 %v1279, 4294901760
  %1281 = vmatpush1.msra.mxu0 %v1280
  %1282 = vmatprep.subr.mxu0 0.0
  %v1283 = vand.u32 %v73, 4294901760
  %v1284 = vsub.f32 %v73, %v1283
  %v1285 = vand.u32 %v1284, 4294901760
  %v1286 = vsub.f32 %v1284, %v1285
  %v1287 = vand.u32 %v1286, 4294901760
  %1288 = vmatpush1.msra.mxu0 %v1287
  %1289 = vmatprep.subr.mxu0 0.0
  %v1290 = vand.u32 %v74, 4294901760
  %v1291 = vsub.f32 %v74, %v1290
  %v1292 = vand.u32 %v1291, 4294901760
  %v1293 = vsub.f32 %v1291, %v1292
  %v1294 = vand.u32 %v1293, 4294901760
  %1295 = vmatpush1.msra.mxu0 %v1294
  %1296 = vmatprep.subr.mxu0 0.0
  %v1297 = vand.u32 %v75, 4294901760
  %v1298 = vsub.f32 %v75, %v1297
  %v1299 = vand.u32 %v1298, 4294901760
  %v1300 = vsub.f32 %v1298, %v1299
  %v1301 = vand.u32 %v1300, 4294901760
  %1302 = vmatpush1.msra.mxu0 %v1301
  %1303 = vmatprep.subr.mxu0 0.0
  %v1304 = vand.u32 %v76, 4294901760
  %v1305 = vsub.f32 %v76, %v1304
  %v1306 = vand.u32 %v1305, 4294901760
  %v1307 = vsub.f32 %v1305, %v1306
  %v1308 = vand.u32 %v1307, 4294901760
  %1309 = vmatpush1.msra.mxu0 %v1308
  %1310 = vmatprep.subr.mxu0 0.0
  %v1311 = vand.u32 %v77, 4294901760
  %v1312 = vsub.f32 %v77, %v1311
  %v1313 = vand.u32 %v1312, 4294901760
  %v1314 = vsub.f32 %v1312, %v1313
  %v1315 = vand.u32 %v1314, 4294901760
  %1316 = vmatpush1.msra.mxu0 %v1315
  %1317 = vmatprep.subr.mxu0 0.0
  %v1318 = vand.u32 %v78, 4294901760
  %v1319 = vsub.f32 %v78, %v1318
  %v1320 = vand.u32 %v1319, 4294901760
  %v1321 = vsub.f32 %v1319, %v1320
  %v1322 = vand.u32 %v1321, 4294901760
  %1323 = vmatpush1.msra.mxu0 %v1322
  %1324 = vmatprep.subr.mxu0 0.0
  %v1325 = vand.u32 %v79, 4294901760
  %v1326 = vsub.f32 %v79, %v1325
  %v1327 = vand.u32 %v1326, 4294901760
  %v1328 = vsub.f32 %v1326, %v1327
  %v1329 = vand.u32 %v1328, 4294901760
  %1330 = vmatpush1.msra.mxu0 %v1329
  %1331 = vmatprep.subr.mxu0 0.0
  %v1332 = vand.u32 %v80, 4294901760
  %v1333 = vsub.f32 %v80, %v1332
  %v1334 = vand.u32 %v1333, 4294901760
  %v1335 = vsub.f32 %v1333, %v1334
  %v1336 = vand.u32 %v1335, 4294901760
  %1337 = vmatpush1.msra.mxu0 %v1336
  %1338 = vmatprep.subr.mxu0 0.0
  %v1339 = vand.u32 %v81, 4294901760
  %v1340 = vsub.f32 %v81, %v1339
  %v1341 = vand.u32 %v1340, 4294901760
  %v1342 = vsub.f32 %v1340, %v1341
  %v1343 = vand.u32 %v1342, 4294901760
  %1344 = vmatpush1.msra.mxu0 %v1343
  %1345 = vmatprep.subr.mxu0 0.0
  %v1346 = vand.u32 %v82, 4294901760
  %v1347 = vsub.f32 %v82, %v1346
  %v1348 = vand.u32 %v1347, 4294901760
  %v1349 = vsub.f32 %v1347, %v1348
  %v1350 = vand.u32 %v1349, 4294901760
  %1351 = vmatpush1.msra.mxu0 %v1350
  %v1352 = vand.u32 %v14, 4294901760
  %1353 = vmatprep.mubr.f32.mxu0 %v1352
  %v1354 = vand.u32 %v13, 4294901760
  %1355 = vmatmul.mubr.f32.gmra.mrb[0].mxu0 %v1354
  %v1356 = vpop.f32.mrb[0].mxu0
  %v1357 = vadd.f32 %v1110, %v1356
  %v1358 = vpop.f32.mrb[0].mxu0
  %v1359 = vand.u32 %v18, 4294901760
  %1360 = vmatprep.mubr.f32.mxu0 %v1359
  %v1361 = vand.u32 %v17, 4294901760
  %1362 = vmatmul.mubr.f32.gmra.mrb[0].mxu0 %v1361
  %v1363 = vpop.f32.mrb[0].mxu0
  %v1364 = vadd.f32 %v1125, %v1363
  %v1365 = vpop.f32.mrb[0].mxu0
  %1366 = vdwg.mxu0
  %1367 = vmatprep.subr.mxu0 0.0
  %v1368 = vand.u32 %v51, 4294901760
  %v1369 = vsub.f32 %v51, %v1368
  %1370 = vmatpush1.msra.mxu0 %v1369
  %1371 = vmatprep.subr.mxu0 0.0
  %v1372 = vand.u32 %v52, 4294901760
  %v1373 = vsub.f32 %v52, %v1372
  %1374 = vmatpush1.msra.mxu0 %v1373
  %1375 = vmatprep.subr.mxu0 0.0
  %v1376 = vand.u32 %v53, 4294901760
  %v1377 = vsub.f32 %v53, %v1376
  %1378 = vmatpush1.msra.mxu0 %v1377
  %1379 = vmatprep.subr.mxu0 0.0
  %v1380 = vand.u32 %v54, 4294901760
  %v1381 = vsub.f32 %v54, %v1380
  %1382 = vmatpush1.msra.mxu0 %v1381
  %1383 = vmatprep.subr.mxu0 0.0
  %v1384 = vand.u32 %v55, 4294901760
  %v1385 = vsub.f32 %v55, %v1384
  %1386 = vmatpush1.msra.mxu0 %v1385
  %1387 = vmatprep.subr.mxu0 0.0
  %v1388 = vand.u32 %v56, 4294901760
  %v1389 = vsub.f32 %v56, %v1388
  %1390 = vmatpush1.msra.mxu0 %v1389
  %1391 = vmatprep.subr.mxu0 0.0
  %v1392 = vand.u32 %v57, 4294901760
  %v1393 = vsub.f32 %v57, %v1392
  %1394 = vmatpush1.msra.mxu0 %v1393
  %1395 = vmatprep.subr.mxu0 0.0
  %v1396 = vand.u32 %v58, 4294901760
  %v1397 = vsub.f32 %v58, %v1396
  %1398 = vmatpush1.msra.mxu0 %v1397
  %1399 = vmatprep.subr.mxu0 0.0
  %v1400 = vand.u32 %v59, 4294901760
  %v1401 = vsub.f32 %v59, %v1400
  %1402 = vmatpush1.msra.mxu0 %v1401
  %1403 = vmatprep.subr.mxu0 0.0
  %v1404 = vand.u32 %v60, 4294901760
  %v1405 = vsub.f32 %v60, %v1404
  %1406 = vmatpush1.msra.mxu0 %v1405
  %1407 = vmatprep.subr.mxu0 0.0
  %v1408 = vand.u32 %v61, 4294901760
  %v1409 = vsub.f32 %v61, %v1408
  %1410 = vmatpush1.msra.mxu0 %v1409
  %1411 = vmatprep.subr.mxu0 0.0
  %v1412 = vand.u32 %v62, 4294901760
  %v1413 = vsub.f32 %v62, %v1412
  %1414 = vmatpush1.msra.mxu0 %v1413
  %1415 = vmatprep.subr.mxu0 0.0
  %v1416 = vand.u32 %v63, 4294901760
  %v1417 = vsub.f32 %v63, %v1416
  %1418 = vmatpush1.msra.mxu0 %v1417
  %1419 = vmatprep.subr.mxu0 0.0
  %v1420 = vand.u32 %v64, 4294901760
  %v1421 = vsub.f32 %v64, %v1420
  %1422 = vmatpush1.msra.mxu0 %v1421
  %1423 = vmatprep.subr.mxu0 0.0
  %v1424 = vand.u32 %v65, 4294901760
  %v1425 = vsub.f32 %v65, %v1424
  %1426 = vmatpush1.msra.mxu0 %v1425
  %1427 = vmatprep.subr.mxu0 0.0
  %v1428 = vand.u32 %v66, 4294901760
  %v1429 = vsub.f32 %v66, %v1428
  %1430 = vmatpush1.msra.mxu0 %v1429
  %1431 = vmatprep.subr.mxu0 0.0
  %v1432 = vand.u32 %v67, 4294901760
  %v1433 = vsub.f32 %v67, %v1432
  %1434 = vmatpush1.msra.mxu0 %v1433
  %1435 = vmatprep.subr.mxu0 0.0
  %v1436 = vand.u32 %v68, 4294901760
  %v1437 = vsub.f32 %v68, %v1436
  %1438 = vmatpush1.msra.mxu0 %v1437
  %1439 = vmatprep.subr.mxu0 0.0
  %v1440 = vand.u32 %v69, 4294901760
  %v1441 = vsub.f32 %v69, %v1440
  %1442 = vmatpush1.msra.mxu0 %v1441
  %1443 = vmatprep.subr.mxu0 0.0
  %v1444 = vand.u32 %v70, 4294901760
  %v1445 = vsub.f32 %v70, %v1444
  %1446 = vmatpush1.msra.mxu0 %v1445
  %1447 = vmatprep.subr.mxu0 0.0
  %v1448 = vand.u32 %v71, 4294901760
  %v1449 = vsub.f32 %v71, %v1448
  %1450 = vmatpush1.msra.mxu0 %v1449
  %1451 = vmatprep.subr.mxu0 0.0
  %v1452 = vand.u32 %v72, 4294901760
  %v1453 = vsub.f32 %v72, %v1452
  %1454 = vmatpush1.msra.mxu0 %v1453
  %1455 = vmatprep.subr.mxu0 0.0
  %v1456 = vand.u32 %v73, 4294901760
  %v1457 = vsub.f32 %v73, %v1456
  %1458 = vmatpush1.msra.mxu0 %v1457
  %1459 = vmatprep.subr.mxu0 0.0
  %v1460 = vand.u32 %v74, 4294901760
  %v1461 = vsub.f32 %v74, %v1460
  %1462 = vmatpush1.msra.mxu0 %v1461
  %1463 = vmatprep.subr.mxu0 0.0
  %v1464 = vand.u32 %v75, 4294901760
  %v1465 = vsub.f32 %v75, %v1464
  %1466 = vmatpush1.msra.mxu0 %v1465
  %1467 = vmatprep.subr.mxu0 0.0
  %v1468 = vand.u32 %v76, 4294901760
  %v1469 = vsub.f32 %v76, %v1468
  %1470 = vmatpush1.msra.mxu0 %v1469
  %1471 = vmatprep.subr.mxu0 0.0
  %v1472 = vand.u32 %v77, 4294901760
  %v1473 = vsub.f32 %v77, %v1472
  %1474 = vmatpush1.msra.mxu0 %v1473
  %1475 = vmatprep.subr.mxu0 0.0
  %v1476 = vand.u32 %v78, 4294901760
  %v1477 = vsub.f32 %v78, %v1476
  %1478 = vmatpush1.msra.mxu0 %v1477
  %1479 = vmatprep.subr.mxu0 0.0
  %v1480 = vand.u32 %v79, 4294901760
  %v1481 = vsub.f32 %v79, %v1480
  %1482 = vmatpush1.msra.mxu0 %v1481
  %1483 = vmatprep.subr.mxu0 0.0
  %v1484 = vand.u32 %v80, 4294901760
  %v1485 = vsub.f32 %v80, %v1484
  %1486 = vmatpush1.msra.mxu0 %v1485
  %1487 = vmatprep.subr.mxu0 0.0
  %v1488 = vand.u32 %v81, 4294901760
  %v1489 = vsub.f32 %v81, %v1488
  %1490 = vmatpush1.msra.mxu0 %v1489
  %1491 = vmatprep.subr.mxu0 0.0
  %v1492 = vand.u32 %v82, 4294901760
  %v1493 = vsub.f32 %v82, %v1492
  %1494 = vmatpush1.msra.mxu0 %v1493
  %v1495 = vand.u32 %v14, 4294901760
  %v1496 = vsub.f32 %v14, %v1495
  %1497 = vmatprep.mubr.f32.mxu0 %v1496
  %v1498 = vand.u32 %v13, 4294901760
  %v1499 = vsub.f32 %v13, %v1498
  %1500 = vmatmul.mubr.f32.gmra.mrb[0].mxu0 %v1499
  %v1501 = vpop.f32.mrb[0].mxu0
  %v1502 = vadd.f32 %v1357, %v1501
  %v1503 = vpop.f32.mrb[0].mxu0
  %v1504 = vand.u32 %v18, 4294901760
  %v1505 = vsub.f32 %v18, %v1504
  %1506 = vmatprep.mubr.f32.mxu0 %v1505
  %v1507 = vand.u32 %v17, 4294901760
  %v1508 = vsub.f32 %v17, %v1507
  %1509 = vmatmul.mubr.f32.gmra.mrb[0].mxu0 %v1508
  %v1510 = vpop.f32.mrb[0].mxu0
  %v1511 = vadd.f32 %v1364, %v1510
  %v1512 = vpop.f32.mrb[0].mxu0
  %1513 = vdwg.mxu0
  %1514 = vmatprep.subr.mxu0 0.0
  %v1515 = vand.u32 %v51, 4294901760
  %1516 = vmatpush1.msra.mxu0 %v1515
  %1517 = vmatprep.subr.mxu0 0.0
  %v1518 = vand.u32 %v52, 4294901760
  %1519 = vmatpush1.msra.mxu0 %v1518
  %1520 = vmatprep.subr.mxu0 0.0
  %v1521 = vand.u32 %v53, 4294901760
  %1522 = vmatpush1.msra.mxu0 %v1521
  %1523 = vmatprep.subr.mxu0 0.0
  %v1524 = vand.u32 %v54, 4294901760
  %1525 = vmatpush1.msra.mxu0 %v1524
  %1526 = vmatprep.subr.mxu0 0.0
  %v1527 = vand.u32 %v55, 4294901760
  %1528 = vmatpush1.msra.mxu0 %v1527
  %1529 = vmatprep.subr.mxu0 0.0
  %v1530 = vand.u32 %v56, 4294901760
  %1531 = vmatpush1.msra.mxu0 %v1530
  %1532 = vmatprep.subr.mxu0 0.0
  %v1533 = vand.u32 %v57, 4294901760
  %1534 = vmatpush1.msra.mxu0 %v1533
  %1535 = vmatprep.subr.mxu0 0.0
  %v1536 = vand.u32 %v58, 4294901760
  %1537 = vmatpush1.msra.mxu0 %v1536
  %1538 = vmatprep.subr.mxu0 0.0
  %v1539 = vand.u32 %v59, 4294901760
  %1540 = vmatpush1.msra.mxu0 %v1539
  %1541 = vmatprep.subr.mxu0 0.0
  %v1542 = vand.u32 %v60, 4294901760
  %1543 = vmatpush1.msra.mxu0 %v1542
  %1544 = vmatprep.subr.mxu0 0.0
  %v1545 = vand.u32 %v61, 4294901760
  %1546 = vmatpush1.msra.mxu0 %v1545
  %1547 = vmatprep.subr.mxu0 0.0
  %v1548 = vand.u32 %v62, 4294901760
  %1549 = vmatpush1.msra.mxu0 %v1548
  %1550 = vmatprep.subr.mxu0 0.0
  %v1551 = vand.u32 %v63, 4294901760
  %1552 = vmatpush1.msra.mxu0 %v1551
  %1553 = vmatprep.subr.mxu0 0.0
  %v1554 = vand.u32 %v64, 4294901760
  %1555 = vmatpush1.msra.mxu0 %v1554
  %1556 = vmatprep.subr.mxu0 0.0
  %v1557 = vand.u32 %v65, 4294901760
  %1558 = vmatpush1.msra.mxu0 %v1557
  %1559 = vmatprep.subr.mxu0 0.0
  %v1560 = vand.u32 %v66, 4294901760
  %1561 = vmatpush1.msra.mxu0 %v1560
  %1562 = vmatprep.subr.mxu0 0.0
  %v1563 = vand.u32 %v67, 4294901760
  %1564 = vmatpush1.msra.mxu0 %v1563
  %1565 = vmatprep.subr.mxu0 0.0
  %v1566 = vand.u32 %v68, 4294901760
  %1567 = vmatpush1.msra.mxu0 %v1566
  %1568 = vmatprep.subr.mxu0 0.0
  %v1569 = vand.u32 %v69, 4294901760
  %1570 = vmatpush1.msra.mxu0 %v1569
  %1571 = vmatprep.subr.mxu0 0.0
  %v1572 = vand.u32 %v70, 4294901760
  %1573 = vmatpush1.msra.mxu0 %v1572
  %1574 = vmatprep.subr.mxu0 0.0
  %v1575 = vand.u32 %v71, 4294901760
  %1576 = vmatpush1.msra.mxu0 %v1575
  %1577 = vmatprep.subr.mxu0 0.0
  %v1578 = vand.u32 %v72, 4294901760
  %1579 = vmatpush1.msra.mxu0 %v1578
  %1580 = vmatprep.subr.mxu0 0.0
  %v1581 = vand.u32 %v73, 4294901760
  %1582 = vmatpush1.msra.mxu0 %v1581
  %1583 = vmatprep.subr.mxu0 0.0
  %v1584 = vand.u32 %v74, 4294901760
  %1585 = vmatpush1.msra.mxu0 %v1584
  %1586 = vmatprep.subr.mxu0 0.0
  %v1587 = vand.u32 %v75, 4294901760
  %1588 = vmatpush1.msra.mxu0 %v1587
  %1589 = vmatprep.subr.mxu0 0.0
  %v1590 = vand.u32 %v76, 4294901760
  %1591 = vmatpush1.msra.mxu0 %v1590
  %1592 = vmatprep.subr.mxu0 0.0
  %v1593 = vand.u32 %v77, 4294901760
  %1594 = vmatpush1.msra.mxu0 %v1593
  %1595 = vmatprep.subr.mxu0 0.0
  %v1596 = vand.u32 %v78, 4294901760
  %1597 = vmatpush1.msra.mxu0 %v1596
  %1598 = vmatprep.subr.mxu0 0.0
  %v1599 = vand.u32 %v79, 4294901760
  %1600 = vmatpush1.msra.mxu0 %v1599
  %1601 = vmatprep.subr.mxu0 0.0
  %v1602 = vand.u32 %v80, 4294901760
  %1603 = vmatpush1.msra.mxu0 %v1602
  %1604 = vmatprep.subr.mxu0 0.0
  %v1605 = vand.u32 %v81, 4294901760
  %1606 = vmatpush1.msra.mxu0 %v1605
  %1607 = vmatprep.subr.mxu0 0.0
  %v1608 = vand.u32 %v82, 4294901760
  %1609 = vmatpush1.msra.mxu0 %v1608
  %v1610 = vand.u32 %v14, 4294901760
  %v1611 = vsub.f32 %v14, %v1610
  %v1612 = vand.u32 %v1611, 4294901760
  %1613 = vmatprep.mubr.f32.mxu0 %v1612
  %v1614 = vand.u32 %v13, 4294901760
  %v1615 = vsub.f32 %v13, %v1614
  %v1616 = vand.u32 %v1615, 4294901760
  %1617 = vmatmul.mubr.f32.gmra.mrb[0].mxu0 %v1616
  %v1618 = vpop.f32.mrb[0].mxu0
  %v1619 = vadd.f32 %v1502, %v1618
  %v1620 = vpop.f32.mrb[0].mxu0
  %v1621 = vand.u32 %v18, 4294901760
  %v1622 = vsub.f32 %v18, %v1621
  %v1623 = vand.u32 %v1622, 4294901760
  %1624 = vmatprep.mubr.f32.mxu0 %v1623
  %v1625 = vand.u32 %v17, 4294901760
  %v1626 = vsub.f32 %v17, %v1625
  %v1627 = vand.u32 %v1626, 4294901760
  %1628 = vmatmul.mubr.f32.gmra.mrb[0].mxu0 %v1627
  %v1629 = vpop.f32.mrb[0].mxu0
  %v1630 = vadd.f32 %v1511, %v1629
  %v1631 = vpop.f32.mrb[0].mxu0
  %1632 = vdwg.mxu0
  %1633 = vmatprep.subr.mxu0 0.0
  %v1634 = vand.u32 %v51, 4294901760
  %v1635 = vsub.f32 %v51, %v1634
  %v1636 = vand.u32 %v1635, 4294901760
  %1637 = vmatpush1.msra.mxu0 %v1636
  %1638 = vmatprep.subr.mxu0 0.0
  %v1639 = vand.u32 %v52, 4294901760
  %v1640 = vsub.f32 %v52, %v1639
  %v1641 = vand.u32 %v1640, 4294901760
  %1642 = vmatpush1.msra.mxu0 %v1641
  %1643 = vmatprep.subr.mxu0 0.0
  %v1644 = vand.u32 %v53, 4294901760
  %v1645 = vsub.f32 %v53, %v1644
  %v1646 = vand.u32 %v1645, 4294901760
  %1647 = vmatpush1.msra.mxu0 %v1646
  %1648 = vmatprep.subr.mxu0 0.0
  %v1649 = vand.u32 %v54, 4294901760
  %v1650 = vsub.f32 %v54, %v1649
  %v1651 = vand.u32 %v1650, 4294901760
  %1652 = vmatpush1.msra.mxu0 %v1651
  %1653 = vmatprep.subr.mxu0 0.0
  %v1654 = vand.u32 %v55, 4294901760
  %v1655 = vsub.f32 %v55, %v1654
  %v1656 = vand.u32 %v1655, 4294901760
  %1657 = vmatpush1.msra.mxu0 %v1656
  %1658 = vmatprep.subr.mxu0 0.0
  %v1659 = vand.u32 %v56, 4294901760
  %v1660 = vsub.f32 %v56, %v1659
  %v1661 = vand.u32 %v1660, 4294901760
  %1662 = vmatpush1.msra.mxu0 %v1661
  %1663 = vmatprep.subr.mxu0 0.0
  %v1664 = vand.u32 %v57, 4294901760
  %v1665 = vsub.f32 %v57, %v1664
  %v1666 = vand.u32 %v1665, 4294901760
  %1667 = vmatpush1.msra.mxu0 %v1666
  %1668 = vmatprep.subr.mxu0 0.0
  %v1669 = vand.u32 %v58, 4294901760
  %v1670 = vsub.f32 %v58, %v1669
  %v1671 = vand.u32 %v1670, 4294901760
  %1672 = vmatpush1.msra.mxu0 %v1671
  %1673 = vmatprep.subr.mxu0 0.0
  %v1674 = vand.u32 %v59, 4294901760
  %v1675 = vsub.f32 %v59, %v1674
  %v1676 = vand.u32 %v1675, 4294901760
  %1677 = vmatpush1.msra.mxu0 %v1676
  %1678 = vmatprep.subr.mxu0 0.0
  %v1679 = vand.u32 %v60, 4294901760
  %v1680 = vsub.f32 %v60, %v1679
  %v1681 = vand.u32 %v1680, 4294901760
  %1682 = vmatpush1.msra.mxu0 %v1681
  %1683 = vmatprep.subr.mxu0 0.0
  %v1684 = vand.u32 %v61, 4294901760
  %v1685 = vsub.f32 %v61, %v1684
  %v1686 = vand.u32 %v1685, 4294901760
  %1687 = vmatpush1.msra.mxu0 %v1686
  %1688 = vmatprep.subr.mxu0 0.0
  %v1689 = vand.u32 %v62, 4294901760
  %v1690 = vsub.f32 %v62, %v1689
  %v1691 = vand.u32 %v1690, 4294901760
  %1692 = vmatpush1.msra.mxu0 %v1691
  %1693 = vmatprep.subr.mxu0 0.0
  %v1694 = vand.u32 %v63, 4294901760
  %v1695 = vsub.f32 %v63, %v1694
  %v1696 = vand.u32 %v1695, 4294901760
  %1697 = vmatpush1.msra.mxu0 %v1696
  %1698 = vmatprep.subr.mxu0 0.0
  %v1699 = vand.u32 %v64, 4294901760
  %v1700 = vsub.f32 %v64, %v1699
  %v1701 = vand.u32 %v1700, 4294901760
  %1702 = vmatpush1.msra.mxu0 %v1701
  %1703 = vmatprep.subr.mxu0 0.0
  %v1704 = vand.u32 %v65, 4294901760
  %v1705 = vsub.f32 %v65, %v1704
  %v1706 = vand.u32 %v1705, 4294901760
  %1707 = vmatpush1.msra.mxu0 %v1706
  %1708 = vmatprep.subr.mxu0 0.0
  %v1709 = vand.u32 %v66, 4294901760
  %v1710 = vsub.f32 %v66, %v1709
  %v1711 = vand.u32 %v1710, 4294901760
  %1712 = vmatpush1.msra.mxu0 %v1711
  %1713 = vmatprep.subr.mxu0 0.0
  %v1714 = vand.u32 %v67, 4294901760
  %v1715 = vsub.f32 %v67, %v1714
  %v1716 = vand.u32 %v1715, 4294901760
  %1717 = vmatpush1.msra.mxu0 %v1716
  %1718 = vmatprep.subr.mxu0 0.0
  %v1719 = vand.u32 %v68, 4294901760
  %v1720 = vsub.f32 %v68, %v1719
  %v1721 = vand.u32 %v1720, 4294901760
  %1722 = vmatpush1.msra.mxu0 %v1721
  %1723 = vmatprep.subr.mxu0 0.0
  %v1724 = vand.u32 %v69, 4294901760
  %v1725 = vsub.f32 %v69, %v1724
  %v1726 = vand.u32 %v1725, 4294901760
  %1727 = vmatpush1.msra.mxu0 %v1726
  %1728 = vmatprep.subr.mxu0 0.0
  %v1729 = vand.u32 %v70, 4294901760
  %v1730 = vsub.f32 %v70, %v1729
  %v1731 = vand.u32 %v1730, 4294901760
  %1732 = vmatpush1.msra.mxu0 %v1731
  %1733 = vmatprep.subr.mxu0 0.0
  %v1734 = vand.u32 %v71, 4294901760
  %v1735 = vsub.f32 %v71, %v1734
  %v1736 = vand.u32 %v1735, 4294901760
  %1737 = vmatpush1.msra.mxu0 %v1736
  %1738 = vmatprep.subr.mxu0 0.0
  %v1739 = vand.u32 %v72, 4294901760
  %v1740 = vsub.f32 %v72, %v1739
  %v1741 = vand.u32 %v1740, 4294901760
  %1742 = vmatpush1.msra.mxu0 %v1741
  %1743 = vmatprep.subr.mxu0 0.0
  %v1744 = vand.u32 %v73, 4294901760
  %v1745 = vsub.f32 %v73, %v1744
  %v1746 = vand.u32 %v1745, 4294901760
  %1747 = vmatpush1.msra.mxu0 %v1746
  %1748 = vmatprep.subr.mxu0 0.0
  %v1749 = vand.u32 %v74, 4294901760
  %v1750 = vsub.f32 %v74, %v1749
  %v1751 = vand.u32 %v1750, 4294901760
  %1752 = vmatpush1.msra.mxu0 %v1751
  %1753 = vmatprep.subr.mxu0 0.0
  %v1754 = vand.u32 %v75, 4294901760
  %v1755 = vsub.f32 %v75, %v1754
  %v1756 = vand.u32 %v1755, 4294901760
  %1757 = vmatpush1.msra.mxu0 %v1756
  %1758 = vmatprep.subr.mxu0 0.0
  %v1759 = vand.u32 %v76, 4294901760
  %v1760 = vsub.f32 %v76, %v1759
  %v1761 = vand.u32 %v1760, 4294901760
  %1762 = vmatpush1.msra.mxu0 %v1761
  %1763 = vmatprep.subr.mxu0 0.0
  %v1764 = vand.u32 %v77, 4294901760
  %v1765 = vsub.f32 %v77, %v1764
  %v1766 = vand.u32 %v1765, 4294901760
  %1767 = vmatpush1.msra.mxu0 %v1766
  %1768 = vmatprep.subr.mxu0 0.0
  %v1769 = vand.u32 %v78, 4294901760
  %v1770 = vsub.f32 %v78, %v1769
  %v1771 = vand.u32 %v1770, 4294901760
  %1772 = vmatpush1.msra.mxu0 %v1771
  %1773 = vmatprep.subr.mxu0 0.0
  %v1774 = vand.u32 %v79, 4294901760
  %v1775 = vsub.f32 %v79, %v1774
  %v1776 = vand.u32 %v1775, 4294901760
  %1777 = vmatpush1.msra.mxu0 %v1776
  %1778 = vmatprep.subr.mxu0 0.0
  %v1779 = vand.u32 %v80, 4294901760
  %v1780 = vsub.f32 %v80, %v1779
  %v1781 = vand.u32 %v1780, 4294901760
  %1782 = vmatpush1.msra.mxu0 %v1781
  %1783 = vmatprep.subr.mxu0 0.0
  %v1784 = vand.u32 %v81, 4294901760
  %v1785 = vsub.f32 %v81, %v1784
  %v1786 = vand.u32 %v1785, 4294901760
  %1787 = vmatpush1.msra.mxu0 %v1786
  %1788 = vmatprep.subr.mxu0 0.0
  %v1789 = vand.u32 %v82, 4294901760
  %v1790 = vsub.f32 %v82, %v1789
  %v1791 = vand.u32 %v1790, 4294901760
  %1792 = vmatpush1.msra.mxu0 %v1791
  %v1793 = vand.u32 %v14, 4294901760
  %1794 = vmatprep.mubr.f32.mxu0 %v1793
  %v1795 = vand.u32 %v13, 4294901760
  %1796 = vmatmul.mubr.f32.gmra.mrb[0].mxu0 %v1795
  %v1797 = vpop.f32.mrb[0].mxu0
  %v1798 = vadd.f32 %v1619, %v1797
  %v1799 = vpop.f32.mrb[0].mxu0
  %v1800 = vand.u32 %v18, 4294901760
  %1801 = vmatprep.mubr.f32.mxu0 %v1800
  %v1802 = vand.u32 %v17, 4294901760
  %1803 = vmatmul.mubr.f32.gmra.mrb[0].mxu0 %v1802
  %v1804 = vpop.f32.mrb[0].mxu0
  %v1805 = vadd.f32 %v1630, %v1804
  %v1806 = vpop.f32.mrb[0].mxu0
  %1807 = vdwg.mxu0
  %1808 = vmatprep.subr.mxu0 0.0
  %v1809 = vand.u32 %v51, 4294901760
  %1810 = vmatpush1.msra.mxu0 %v1809
  %1811 = vmatprep.subr.mxu0 0.0
  %v1812 = vand.u32 %v52, 4294901760
  %1813 = vmatpush1.msra.mxu0 %v1812
  %1814 = vmatprep.subr.mxu0 0.0
  %v1815 = vand.u32 %v53, 4294901760
  %1816 = vmatpush1.msra.mxu0 %v1815
  %1817 = vmatprep.subr.mxu0 0.0
  %v1818 = vand.u32 %v54, 4294901760
  %1819 = vmatpush1.msra.mxu0 %v1818
  %1820 = vmatprep.subr.mxu0 0.0
  %v1821 = vand.u32 %v55, 4294901760
  %1822 = vmatpush1.msra.mxu0 %v1821
  %1823 = vmatprep.subr.mxu0 0.0
  %v1824 = vand.u32 %v56, 4294901760
  %1825 = vmatpush1.msra.mxu0 %v1824
  %1826 = vmatprep.subr.mxu0 0.0
  %v1827 = vand.u32 %v57, 4294901760
  %1828 = vmatpush1.msra.mxu0 %v1827
  %1829 = vmatprep.subr.mxu0 0.0
  %v1830 = vand.u32 %v58, 4294901760
  %1831 = vmatpush1.msra.mxu0 %v1830
  %1832 = vmatprep.subr.mxu0 0.0
  %v1833 = vand.u32 %v59, 4294901760
  %1834 = vmatpush1.msra.mxu0 %v1833
  %1835 = vmatprep.subr.mxu0 0.0
  %v1836 = vand.u32 %v60, 4294901760
  %1837 = vmatpush1.msra.mxu0 %v1836
  %1838 = vmatprep.subr.mxu0 0.0
  %v1839 = vand.u32 %v61, 4294901760
  %1840 = vmatpush1.msra.mxu0 %v1839
  %1841 = vmatprep.subr.mxu0 0.0
  %v1842 = vand.u32 %v62, 4294901760
  %1843 = vmatpush1.msra.mxu0 %v1842
  %1844 = vmatprep.subr.mxu0 0.0
  %v1845 = vand.u32 %v63, 4294901760
  %1846 = vmatpush1.msra.mxu0 %v1845
  %1847 = vmatprep.subr.mxu0 0.0
  %v1848 = vand.u32 %v64, 4294901760
  %1849 = vmatpush1.msra.mxu0 %v1848
  %1850 = vmatprep.subr.mxu0 0.0
  %v1851 = vand.u32 %v65, 4294901760
  %1852 = vmatpush1.msra.mxu0 %v1851
  %1853 = vmatprep.subr.mxu0 0.0
  %v1854 = vand.u32 %v66, 4294901760
  %1855 = vmatpush1.msra.mxu0 %v1854
  %1856 = vmatprep.subr.mxu0 0.0
  %v1857 = vand.u32 %v67, 4294901760
  %1858 = vmatpush1.msra.mxu0 %v1857
  %1859 = vmatprep.subr.mxu0 0.0
  %v1860 = vand.u32 %v68, 4294901760
  %1861 = vmatpush1.msra.mxu0 %v1860
  %1862 = vmatprep.subr.mxu0 0.0
  %v1863 = vand.u32 %v69, 4294901760
  %1864 = vmatpush1.msra.mxu0 %v1863
  %1865 = vmatprep.subr.mxu0 0.0
  %v1866 = vand.u32 %v70, 4294901760
  %1867 = vmatpush1.msra.mxu0 %v1866
  %1868 = vmatprep.subr.mxu0 0.0
  %v1869 = vand.u32 %v71, 4294901760
  %1870 = vmatpush1.msra.mxu0 %v1869
  %1871 = vmatprep.subr.mxu0 0.0
  %v1872 = vand.u32 %v72, 4294901760
  %1873 = vmatpush1.msra.mxu0 %v1872
  %1874 = vmatprep.subr.mxu0 0.0
  %v1875 = vand.u32 %v73, 4294901760
  %1876 = vmatpush1.msra.mxu0 %v1875
  %1877 = vmatprep.subr.mxu0 0.0
  %v1878 = vand.u32 %v74, 4294901760
  %1879 = vmatpush1.msra.mxu0 %v1878
  %1880 = vmatprep.subr.mxu0 0.0
  %v1881 = vand.u32 %v75, 4294901760
  %1882 = vmatpush1.msra.mxu0 %v1881
  %1883 = vmatprep.subr.mxu0 0.0
  %v1884 = vand.u32 %v76, 4294901760
  %1885 = vmatpush1.msra.mxu0 %v1884
  %1886 = vmatprep.subr.mxu0 0.0
  %v1887 = vand.u32 %v77, 4294901760
  %1888 = vmatpush1.msra.mxu0 %v1887
  %1889 = vmatprep.subr.mxu0 0.0
  %v1890 = vand.u32 %v78, 4294901760
  %1891 = vmatpush1.msra.mxu0 %v1890
  %1892 = vmatprep.subr.mxu0 0.0
  %v1893 = vand.u32 %v79, 4294901760
  %1894 = vmatpush1.msra.mxu0 %v1893
  %1895 = vmatprep.subr.mxu0 0.0
  %v1896 = vand.u32 %v80, 4294901760
  %1897 = vmatpush1.msra.mxu0 %v1896
  %1898 = vmatprep.subr.mxu0 0.0
  %v1899 = vand.u32 %v81, 4294901760
  %1900 = vmatpush1.msra.mxu0 %v1899
  %1901 = vmatprep.subr.mxu0 0.0
  %v1902 = vand.u32 %v82, 4294901760
  %1903 = vmatpush1.msra.mxu0 %v1902
  %v1904 = vand.u32 %v14, 4294901760
  %1905 = vmatprep.mubr.f32.mxu0 %v1904
  %v1906 = vand.u32 %v13, 4294901760
  %1907 = vmatmul.mubr.f32.gmra.mrb[0].mxu0 %v1906
  %v1908 = vpop.f32.mrb[0].mxu0
  %v1909 = vadd.f32 %v1798, %v1908
  %v1910 = vpop.f32.mrb[0].mxu0
  %v1911 = vand.u32 %v18, 4294901760
  %1912 = vmatprep.mubr.f32.mxu0 %v1911
  %v1913 = vand.u32 %v17, 4294901760
  %1914 = vmatmul.mubr.f32.gmra.mrb[0].mxu0 %v1913
  %v1915 = vpop.f32.mrb[0].mxu0
  %v1916 = vadd.f32 %v1805, %v1915
  %v1917 = vpop.f32.mrb[0].mxu0
  %1918 = vdwg.mxu0
  %v1919 = vrot.slane %v1916, 4
  %v1920 = vadd.f32 %v1916, %v1919
  %v1921 = vrot.slane %v1920, 2
  %v1922 = vadd.f32 %v1920, %v1921
  %v1923 = vrot.slane %v1922, 1
  %v1924 = vadd.f32 %v1922, %v1923
  %v1925 = vmul.f32 %v1909, %v1924
  %v1926 = vmul.f32 %v1925, %v1925
  %v1927 = vrot.slane %v1926, 4
  %v1928 = vadd.f32 %v1926, %v1927
  %v1929 = vrot.slane %v1928, 2
  %v1930 = vadd.f32 %v1928, %v1929
  %v1931 = vrot.slane %v1930, 1
  %v1932 = vadd.f32 %v1930, %v1931
  %vm1933 = vcmp.eq.f32.partialorder %v1932, 0.0
  %v1934 = vrsqrt.pop %v1932
  %v1935 = vsel %vm1933, 1.0, %v1934
  %v1936 = vmul.f32 %v1925, %v1935
  %1937 = vst [vmem:[%s2] sm:$0xff] %v1936
  // Predicated region
  $region10: #{positional_embedding.1} parent=0 // pred_check
    _
  $region11: #{positional_embedding.1} parent=0 // pred_check_branch
    %1939 = sbr.rel (0) target = $region13
  $region12: #{positional_embedding.1} parent=0 // pred_region
    _
  $region13: #{positional_embedding.1} parent=0 // pred_fallthru
    _
  // Predicated region
  $region14: #{positional_embedding.1} parent=0 // pred_check
    _
  $region15: #{positional_embedding.1} parent=0 // pred_check_branch
    %1941 = sbr.rel (0) target = $region17
  $region16: #{positional_embedding.1} parent=0 // pred_region
    _
  $region17: #{positional_embedding.1} parent=0 // pred_fallthru
    _

</llo_original>
